<compile_context>
chip_gen: v7x
topology: tpu7x:2x2x1
jax: 0.10.0
libtpu: 0.0.40
codegen_flags: <defaults>
</compile_context>

<pallas_src>
import functools

import jax
import jax.numpy as jnp
from jax.experimental import pallas as pl
from jax.experimental.pallas import tpu as pltpu

H1_PAD = 512   # 400 padded up to a lane multiple
H2_PAD = 384   # 300 padded up to a lane multiple (= 3*128; do not round to 512)
PAD = 128      # lane padding for the fused [action|state] input and the output


def _actor_kernel(xa_ref, w1_ref, b1_ref, w2_ref, b2_ref, w3_ref, b3_ref,
                  o_ref, *, threshold, max_action, action_dim):
    # xa_ref: (TM, PAD) f32 laid out as [action | state | zeros]
    xa = xa_ref[...]
    xa_bf = xa.astype(jnp.bfloat16)

    # l1 (single fused matmul over the padded K axis) + relu
    h1 = jnp.dot(xa_bf, w1_ref[...],
                 preferred_element_type=jnp.float32) + b1_ref[...]
    h1 = jnp.maximum(h1, 0.0)

    # l2 + relu
    h2 = jnp.dot(h1.astype(jnp.bfloat16), w2_ref[...],
                 preferred_element_type=jnp.float32) + b2_ref[...]
    h2 = jnp.maximum(h2, 0.0)

    # l3 -> scaled tanh (output already lane-dense: PAD wide, zeros past action_dim)
    a = jnp.dot(h2.astype(jnp.bfloat16), w3_ref[...],
                preferred_element_type=jnp.float32) + b3_ref[...]
    a = (threshold * max_action) * jnp.tanh(a)

    # residual action lives in lanes [0, action_dim) of xa; zero the rest
    lane = jax.lax.broadcasted_iota(jnp.int32, o_ref.shape, 1)
    residual = jnp.where(lane < action_dim, xa, 0.0)
    o_ref[...] = jnp.clip(a + residual, -max_action, max_action).astype(o_ref.dtype)


def _round_up(x, m):
    return -(-x // m) * m


def _auto_tm(batch, cap=1024):
    """Batch tile: big enough to amortize per-step overhead, >=2 tiles when
    possible (v7x dual TensorCore), multiple of 8, capped for VMEM safety."""
    b8 = _round_up(max(batch, 1), 8)
    if b8 <= 16:
        return b8
    return min(cap, _round_up(pl.cdiv(b8, 2), 8))


def actor_forward(state, action, params, *, max_action, threshold=0.05, tm=None):
    """Pallas equivalent of Actor.forward(state, action).

    state: (B, state_dim) f32, action: (B, action_dim) f32.
    params: packed / padded weights from `pack_params` (weights bf16, biases f32).
    """
    w1p, b1p, w2p, b2p, w3p, b3p = params
    batch, action_dim = action.shape
    state_dim = state.shape[1]
    in_pad = w1p.shape[0]
    out_pad = w3p.shape[1]
    assert in_pad == out_pad == PAD and action_dim + state_dim <= PAD

    # Fused, lane-dense layer-1 input: [action | state | zeros]  (B, PAD)
    xa = jnp.zeros((batch, PAD), jnp.float32)
    xa = xa.at[:, :action_dim].set(action)
    xa = xa.at[:, action_dim:action_dim + state_dim].set(state)

    if tm is None:
        tm = _auto_tm(batch)
    grid = (pl.cdiv(batch, tm),)   # ragged last tile handled by Pallas

    kernel = functools.partial(
        _actor_kernel, threshold=float(threshold), max_action=float(max_action),
        action_dim=action_dim)

    def pinned(shape):   # weights/biases: same block every step -> VMEM resident
        return pl.BlockSpec(shape, lambda i: (0, 0))

    weight_bytes = sum(int(w.size) * w.dtype.itemsize
                       for w in (w1p, b1p, w2p, b2p, w3p, b3p))
    cost = pl.CostEstimate(
        flops=2 * batch * (PAD * H1_PAD + H1_PAD * H2_PAD + H2_PAD * PAD),
        transcendentals=batch * PAD,
        bytes_accessed=batch * PAD * 4 * 2 + weight_bytes)

    out = pl.pallas_call(
        kernel,
        out_shape=jax.ShapeDtypeStruct((batch, PAD), jnp.float32),
        grid=grid,
        in_specs=[
            pl.BlockSpec((tm, PAD), lambda i: (i, 0)),   # xa tiles stream over batch
            pinned(w1p.shape), pinned(b1p.shape),
            pinned(w2p.shape), pinned(b2p.shape),
            pinned(w3p.shape), pinned(b3p.shape),
        ],
        out_specs=pl.BlockSpec((tm, PAD), lambda i: (i, 0)),
        compiler_params=pltpu.CompilerParams(
            dimension_semantics=("parallel",),           # both TCs on v7x
            vmem_limit_bytes=(64 * 1024 * 1024 if tm > 1024 else None)),
        cost_estimate=cost,
    )(xa, w1p, b1p, w2p, b2p, w3p, b3p)

    return out[:, :action_dim]


def pack_params(w1, b1, w2, b2, w3, b3, state_dim, action_dim,
                *, weight_dtype=jnp.bfloat16):
    """Pack torch-layout weights for the kernel.

    Inputs are (in_features, out_features) f32 arrays (i.e. torch weight.T);
    w1's input axis is in torch concat order [state | action].  The l1 input
    axis is reordered to [action | state] and zero-padded to PAD lanes; hidden
    dims are padded to (H1_PAD, H2_PAD); the output dim is padded to PAD.
    Padding is zero-filled so results are exact.
    """
    def pad_to(x, shape):
        return jnp.zeros(shape, x.dtype).at[:x.shape[0], :x.shape[1]].set(x)

    w1_r = jnp.concatenate([w1[state_dim:], w1[:state_dim]], axis=0)  # [action|state]
    w1p = pad_to(w1_r, (PAD, H1_PAD)).astype(weight_dtype)
    b1p = pad_to(b1.reshape(1, -1), (1, H1_PAD))
    w2p = pad_to(w2, (H1_PAD, H2_PAD)).astype(weight_dtype)
    b2p = pad_to(b2.reshape(1, -1), (1, H2_PAD))
    w3p = pad_to(w3, (H2_PAD, PAD)).astype(weight_dtype)
    b3p = pad_to(b3.reshape(1, -1), (1, PAD))
    return (w1p, b1p, w2p, b2p, w3p, b3p)


def init_actor_params(key, state_dim, action_dim):
    """nn.Linear-style U(-1/sqrt(fan_in), +1/sqrt(fan_in)) init (unpadded f32)."""
    def linear(k, fan_in, fan_out):
        kw, kb = jax.random.split(k)
        bound = 1.0 / float(fan_in) ** 0.5
        w = jax.random.uniform(kw, (fan_in, fan_out), jnp.float32, -bound, bound)
        b = jax.random.uniform(kb, (fan_out,), jnp.float32, -bound, bound)
        return w, b

    k1, k2, k3 = jax.random.split(key, 3)
    w1, b1 = linear(k1, state_dim + action_dim, 400)
    w2, b2 = linear(k2, 400, 300)
    w3, b3 = linear(k3, 300, action_dim)
    return (w1, b1, w2, b2, w3, b3)


def actor_reference_torch(state, action, raw_params, *, max_action, threshold):
    """Pure f32 reference with the original torch semantics (concat/relu/relu/tanh)."""
    w1, b1, w2, b2, w3, b3 = raw_params
    x = jnp.concatenate([state, action], axis=1)
    h1 = jax.nn.relu(x @ w1 + b1)
    h2 = jax.nn.relu(h1 @ w2 + b2)
    a = threshold * max_action * jnp.tanh(h2 @ w3 + b3)
    return jnp.clip(a + action, -max_action, max_action)


def actor_reference_packed(state, action, params, *, max_action, threshold):
    """Reference with numerics identical to the kernel (same bf16 casts / padding)."""
    w1p, b1p, w2p, b2p, w3p, b3p = params
    batch, action_dim = action.shape
    state_dim = state.shape[1]
    xa = jnp.zeros((batch, PAD), jnp.float32)
    xa = xa.at[:, :action_dim].set(action)
    xa = xa.at[:, action_dim:action_dim + state_dim].set(state)
    h1 = jnp.maximum(jnp.dot(xa.astype(jnp.bfloat16), w1p,
                             preferred_element_type=jnp.float32) + b1p, 0.0)
    h2 = jnp.maximum(jnp.dot(h1.astype(jnp.bfloat16), w2p,
                             preferred_element_type=jnp.float32) + b2p, 0.0)
    a = threshold * max_action * jnp.tanh(
        jnp.dot(h2.astype(jnp.bfloat16), w3p,
                preferred_element_type=jnp.float32) + b3p)
    res = jnp.where(jnp.arange(PAD) < action_dim, xa, 0.0)
    return jnp.clip(a + res, -max_action, max_action)[:, :action_dim]


if __name__ == "__main__":
    key = jax.random.PRNGKey(0)
    state_dim, action_dim = 17, 6
    max_action, threshold = 1.0, 0.05
    # BCQ perturbs num_samples actions per state; batch*num_samples folds into
    # one M dimension.  200 rows is not a multiple of the tile -> exercises the
    # ragged-last-tile path (no wrapper-side batch padding).
    batch = 200

    key, ks, ka, kp = jax.random.split(key, 4)
    state = jax.random.normal(ks, (batch, state_dim), jnp.float32)
    action = jax.random.uniform(ka, (batch, action_dim), jnp.float32,
                                -max_action, max_action)
    raw_params = init_actor_params(kp, state_dim, action_dim)
    params = pack_params(*raw_params, state_dim, action_dim)

    fwd = jax.jit(lambda s, a, p: actor_forward(
        s, a, p, max_action=max_action, threshold=threshold))

    out = jax.block_until_ready(fwd(state, action, params))
    assert out.shape == (batch, action_dim)

    # Tight check: identical numerics (same bf16 weights / casts).
    ref_packed = actor_reference_packed(state, action, params,
                                        max_action=max_action, threshold=threshold)
    assert jnp.allclose(out, ref_packed, atol=1e-4, rtol=1e-4), \
        "mismatch vs bf16-matched reference"

    # Loose check: semantic fidelity to the original f32 torch Actor.
    ref_torch = actor_reference_torch(state, action, raw_params,
                                      max_action=max_action, threshold=threshold)
    assert jnp.allclose(out, ref_torch, atol=5e-3), "mismatch vs f32 torch reference"

    # Small / ragged batch path (batch < one 8-row sublane group of the tile).
    out_s = jax.block_until_ready(fwd(state[:5], action[:5], params))
    ref_s = actor_reference_packed(state[:5], action[:5], params,
                                   max_action=max_action, threshold=threshold)
    assert out_s.shape == (5, action_dim)
    assert jnp.allclose(out_s, ref_s, atol=1e-4, rtol=1e-4), "mismatch (small batch)"

    print("KERNEL_OK")
</pallas_src>

<mosaic_0001>
module attributes {stable_mosaic.version = 11 : i64} {
  func.func @_actor_kernel(%arg0: i32, %arg1: memref<104x128xf32, #tpu.memory_space<vmem>>, %arg2: memref<128x512xbf16, #tpu.memory_space<vmem>>, %arg3: memref<1x512xf32, #tpu.memory_space<vmem>>, %arg4: memref<512x384xbf16, #tpu.memory_space<vmem>>, %arg5: memref<1x384xf32, #tpu.memory_space<vmem>>, %arg6: memref<384x128xbf16, #tpu.memory_space<vmem>>, %arg7: memref<1x128xf32, #tpu.memory_space<vmem>>, %arg8: memref<104x128xf32, #tpu.memory_space<vmem>>) attributes {dimension_semantics = [#tpu.dimension_semantics<parallel>], iteration_bounds = array<i64: 2>, scalar_prefetch = 0 : i64, scratch_operands = 0 : i64, tpu.core_type = #tpu.core_type<tc>, window_params = [{transform_indices = @transform_0, window_bounds = array<i64: 104, 128>}, {pipeline_mode = #tpu.pipeline_mode<synchronous>, transform_indices = @transform_1, window_bounds = array<i64: 128, 512>}, {pipeline_mode = #tpu.pipeline_mode<synchronous>, transform_indices = @transform_2, window_bounds = array<i64: 1, 512>}, {pipeline_mode = #tpu.pipeline_mode<synchronous>, transform_indices = @transform_3, window_bounds = array<i64: 512, 384>}, {pipeline_mode = #tpu.pipeline_mode<synchronous>, transform_indices = @transform_4, window_bounds = array<i64: 1, 384>}, {pipeline_mode = #tpu.pipeline_mode<synchronous>, transform_indices = @transform_5, window_bounds = array<i64: 384, 128>}, {pipeline_mode = #tpu.pipeline_mode<synchronous>, transform_indices = @transform_6, window_bounds = array<i64: 1, 128>}, {transform_indices = @transform_7, window_bounds = array<i64: 104, 128>}]} {
    %c0 = arith.constant 0 : index
    %c0_0 = arith.constant 0 : index
    %0 = vector.load %arg1[%c0, %c0_0] : memref<104x128xf32, #tpu.memory_space<vmem>>, vector<104x128xf32>
    %1 = arith.truncf %0 : vector<104x128xf32> to vector<104x128xbf16>
    %c0_1 = arith.constant 0 : index
    %c0_2 = arith.constant 0 : index
    %2 = vector.load %arg2[%c0_1, %c0_2] : memref<128x512xbf16, #tpu.memory_space<vmem>>, vector<128x512xbf16>
    %cst = arith.constant dense<0.000000e+00> : vector<104x512xf32>
    %3 = tpu.matmul %1, %2, %cst {dimension_numbers = #tpu.dot_dimension_numbers<[1], [0], [0], [1], [0, 0, 1, 1], [], []>} : vector<104x128xbf16>, vector<128x512xbf16>, vector<104x512xf32> -> vector<104x512xf32>
    %c0_3 = arith.constant 0 : index
    %c0_4 = arith.constant 0 : index
    %4 = vector.load %arg3[%c0_3, %c0_4] : memref<1x512xf32, #tpu.memory_space<vmem>>, vector<1x512xf32>
    %5 = vector.broadcast %4 : vector<1x512xf32> to vector<104x512xf32>
    %6 = arith.addf %3, %5 : vector<104x512xf32>
    %cst_5 = arith.constant 0.000000e+00 : f32
    %7 = vector.broadcast %cst_5 : f32 to vector<104x512xf32>
    %8 = arith.maximumf %6, %7 : vector<104x512xf32>
    %9 = arith.truncf %8 : vector<104x512xf32> to vector<104x512xbf16>
    %c0_6 = arith.constant 0 : index
    %c0_7 = arith.constant 0 : index
    %10 = vector.load %arg4[%c0_6, %c0_7] : memref<512x384xbf16, #tpu.memory_space<vmem>>, vector<512x384xbf16>
    %cst_8 = arith.constant dense<0.000000e+00> : vector<104x384xf32>
    %11 = tpu.matmul %9, %10, %cst_8 {dimension_numbers = #tpu.dot_dimension_numbers<[1], [0], [0], [1], [0, 0, 1, 1], [], []>} : vector<104x512xbf16>, vector<512x384xbf16>, vector<104x384xf32> -> vector<104x384xf32>
    %c0_9 = arith.constant 0 : index
    %c0_10 = arith.constant 0 : index
    %12 = vector.load %arg5[%c0_9, %c0_10] : memref<1x384xf32, #tpu.memory_space<vmem>>, vector<1x384xf32>
    %13 = vector.broadcast %12 : vector<1x384xf32> to vector<104x384xf32>
    %14 = arith.addf %11, %13 : vector<104x384xf32>
    %cst_11 = arith.constant 0.000000e+00 : f32
    %15 = vector.broadcast %cst_11 : f32 to vector<104x384xf32>
    %16 = arith.maximumf %14, %15 : vector<104x384xf32>
    %17 = arith.truncf %16 : vector<104x384xf32> to vector<104x384xbf16>
    %c0_12 = arith.constant 0 : index
    %c0_13 = arith.constant 0 : index
    %18 = vector.load %arg6[%c0_12, %c0_13] : memref<384x128xbf16, #tpu.memory_space<vmem>>, vector<384x128xbf16>
    %cst_14 = arith.constant dense<0.000000e+00> : vector<104x128xf32>
    %19 = tpu.matmul %17, %18, %cst_14 {dimension_numbers = #tpu.dot_dimension_numbers<[1], [0], [0], [1], [0, 0, 1, 1], [], []>} : vector<104x384xbf16>, vector<384x128xbf16>, vector<104x128xf32> -> vector<104x128xf32>
    %c0_15 = arith.constant 0 : index
    %c0_16 = arith.constant 0 : index
    %20 = vector.load %arg7[%c0_15, %c0_16] : memref<1x128xf32, #tpu.memory_space<vmem>>, vector<1x128xf32>
    %21 = vector.broadcast %20 : vector<1x128xf32> to vector<104x128xf32>
    %22 = arith.addf %19, %21 : vector<104x128xf32>
    %23 = math.tanh %22 : vector<104x128xf32>
    %cst_17 = arith.constant 5.000000e-02 : f32
    %24 = vector.broadcast %cst_17 : f32 to vector<104x128xf32>
    %25 = arith.mulf %24, %23 : vector<104x128xf32>
    %26 = tpu.iota {dimensions = array<i32: 1>} : vector<104x128xi32>
    %c6_i32 = arith.constant 6 : i32
    %27 = vector.broadcast %c6_i32 : i32 to vector<104x128xi32>
    %28 = arith.cmpi slt, %26, %27 : vector<104x128xi32>
    %cst_18 = arith.constant 0.000000e+00 : f32
    %29 = vector.broadcast %cst_18 : f32 to vector<104x128xf32>
    %30 = arith.select %28, %0, %29 : vector<104x128xi1>, vector<104x128xf32>
    %31 = arith.addf %25, %30 : vector<104x128xf32>
    %cst_19 = arith.constant -1.000000e+00 : f32
    %cst_20 = arith.constant 1.000000e+00 : f32
    %32 = vector.broadcast %cst_19 : f32 to vector<104x128xf32>
    %33 = arith.maximumf %32, %31 : vector<104x128xf32>
    %34 = vector.broadcast %cst_20 : f32 to vector<104x128xf32>
    %35 = arith.minimumf %34, %33 : vector<104x128xf32>
    %c0_21 = arith.constant 0 : index
    %c0_22 = arith.constant 0 : index
    %36 = vector.load %arg8[%c0_21, %c0_22] : memref<104x128xf32, #tpu.memory_space<vmem>>, vector<104x128xf32>
    tpu.vector_store %arg8[%c0_21, %c0_22], %35 {strides = array<i32>} : memref<104x128xf32, #tpu.memory_space<vmem>>, vector<104x128xf32>,
    return
  }
  func.func @transform_0(%arg0: i32) -> (i32, i32) {
    %c0_i32 = arith.constant 0 : i32
    %c0_i32_0 = arith.constant 0 : i32
    return %arg0, %c0_i32 : i32, i32
  }
  func.func @transform_1(%arg0: i32) -> (i32, i32) {
    %c0_i32 = arith.constant 0 : i32
    %c0_i32_0 = arith.constant 0 : i32
    %c0_i32_1 = arith.constant 0 : i32
    return %c0_i32, %c0_i32_0 : i32, i32
  }
  func.func @transform_2(%arg0: i32) -> (i32, i32) {
    %c0_i32 = arith.constant 0 : i32
    %c0_i32_0 = arith.constant 0 : i32
    %c0_i32_1 = arith.constant 0 : i32
    return %c0_i32, %c0_i32_0 : i32, i32
  }
  func.func @transform_3(%arg0: i32) -> (i32, i32) {
    %c0_i32 = arith.constant 0 : i32
    %c0_i32_0 = arith.constant 0 : i32
    %c0_i32_1 = arith.constant 0 : i32
    return %c0_i32, %c0_i32_0 : i32, i32
  }
  func.func @transform_4(%arg0: i32) -> (i32, i32) {
    %c0_i32 = arith.constant 0 : i32
    %c0_i32_0 = arith.constant 0 : i32
    %c0_i32_1 = arith.constant 0 : i32
    return %c0_i32, %c0_i32_0 : i32, i32
  }
  func.func @transform_5(%arg0: i32) -> (i32, i32) {
    %c0_i32 = arith.constant 0 : i32
    %c0_i32_0 = arith.constant 0 : i32
    %c0_i32_1 = arith.constant 0 : i32
    return %c0_i32, %c0_i32_0 : i32, i32
  }
  func.func @transform_6(%arg0: i32) -> (i32, i32) {
    %c0_i32 = arith.constant 0 : i32
    %c0_i32_0 = arith.constant 0 : i32
    %c0_i32_1 = arith.constant 0 : i32
    return %c0_i32, %c0_i32_0 : i32, i32
  }
  func.func @transform_7(%arg0: i32) -> (i32, i32) {
    %c0_i32 = arith.constant 0 : i32
    %c0_i32_0 = arith.constant 0 : i32
    return %arg0, %c0_i32 : i32, i32
  }
}

</mosaic_0001>

<llo_original>
// kernel: _lambda_.1
$region0: #{_lambda_.1}
  #allocation0 [shape = 'u32[]', space=smem, size = 0x4, offset = 0x4, fixed_abs, tag = 'smem constant byte address 0x4 - core index']
  #allocation1 [shape = 'u32[144,128]{1,0:T(1,128)}', space=vmem, size = 0x12000, scoped, tag = 'internal scratch']
  %s0 = inlined_call_operand.vmem [shape: f32[200,128], index: 0, kind: input, shape index: {}]
  %s1 = inlined_call_operand.vmem [shape: bf16[128,512], index: 1, kind: input, shape index: {}]
  %s2 = inlined_call_operand.vmem [shape: f32[1,512], index: 2, kind: input, shape index: {}]
  %s3 = inlined_call_operand.vmem [shape: bf16[512,384], index: 3, kind: input, shape index: {}]
  %s4 = inlined_call_operand.vmem [shape: f32[1,384], index: 4, kind: input, shape index: {}]
  %s5 = inlined_call_operand.vmem [shape: bf16[384,128], index: 5, kind: input, shape index: {}]
  %s6 = inlined_call_operand.vmem [shape: f32[1,128], index: 6, kind: input, shape index: {}]
  %s7 = inlined_call_operand.vmem [shape: f32[200,128], index: 7, kind: output, shape index: {}]
  %s8 = sld [smem:[#allocation0]]
  $region109: #{_lambda_.1} parent=0
    _
  %s10 = ssub.s32 1, %s8
  %s11 = scalar_select 0, %s10, %s8
  $region1: #{_lambda_.1} parent=0
    #allocation2 [shape = 'u8[106496]{0}', space=vmem, size = 0x1a000, scoped, tag = 'output window, operand 0']
    loop: start=0, step=1, limit=4
    $region2: #{_lambda_.1} parent=1 // loop_pre_header
      _
    $region3: #{_lambda_.1} parent=1 // loop_header
      %s13 = sphi 0, %s17
      %p14 = scmp.ge.s32.totalorder %s13, 4
      %s23 = sphi 0, %s25
      %s26 = sphi 0, %s23
      %s27 = sphi 0, %s26
      %s43 = sphi 0, %s27
      %s47 = sphi 0, %s47
      %s49 = sphi 0, %s47
      %s50 = sphi 0, %s49
      %s64 = sphi 0, %s50
      %s68 = sphi 0, %s68
      %s70 = sphi 0, %s68
      %s71 = sphi 0, %s70
      %s85 = sphi 0, %s71
      %s89 = sphi 0, %s89
      %s91 = sphi 0, %s89
      %s92 = sphi 0, %s91
      %s106 = sphi 0, %s92
      %s110 = sphi 0, %s110
      %s112 = sphi 0, %s110
      %s113 = sphi 0, %s112
      %s127 = sphi 0, %s113
      %s131 = sphi 0, %s131
      %s133 = sphi 0, %s131
      %s134 = sphi 0, %s133
      %s148 = sphi 0, %s134
      %s152 = sphi 0, %s152
      %s154 = sphi 0, %s152
      %s155 = sphi 0, %s154
      %s169 = sphi 0, %s155
      %s175 = sphi 0, %s177
      %s178 = sphi 0, %s175
      %s179 = sphi 0, %s178
      %s195 = sphi 0, %s179
    $region4: #{_lambda_.1} parent=1 // loop_header_branch
      %16 = sbr.rel (%p14) target = $region8
    $region5: #{_lambda_.1} parent=1 // loop_body
      %s18 = ssub.s32 %s13, 1
      %s19 = ssub.s32 %s13, 2
      %s20 = sadd.s32 %s13, 1
      %s21 = ssub.s32 %s13, %s20
      %p22 = scmp.eq.s32.totalorder %s21, 0
      %s24 = sadd.s32 %s23, 1
      %s25 = scalar_select %p22, %s23, %s24
      %p28 = pneg %p22
      %p29 = scmp.eq.s32.totalorder %s13, 1
      %p30 = por %p28, %p29
      %p31 = scmp.ne.s32.totalorder %s23, %s26
      %p32 = scmp.eq.s32.totalorder %s13, 0
      %p33 = por %p31, %p32
      %p34 = scmp.ne.s32.totalorder %s23, %s26
      %p35 = scmp.eq.s32.totalorder %s18, 1
      %p36 = por %p34, %p35
      %p37 = scmp.ne.s32.totalorder %s26, %s27
      %p38 = scmp.eq.s32.totalorder %s18, 0
      %p39 = por %p37, %p38
      %p40 = scmp.ne.s32.totalorder %s26, %s27
      %p41 = scmp.eq.s32.totalorder %s19, 1
      %p42 = por %p40, %p41
      %p44 = scmp.ne.s32.totalorder %s27, %s43
      %p45 = scmp.eq.s32.totalorder %s19, 0
      %p46 = por %p44, %p45
      %s48 = sadd.s32 %s47, 1
      %p51 = scmp.eq.s32.totalorder %s13, 1
      %p52 = scmp.ne.s32.totalorder %s47, %s49
      %p53 = scmp.eq.s32.totalorder %s13, 0
      %p54 = por %p52, %p53
      %p55 = scmp.ne.s32.totalorder %s47, %s49
      %p56 = scmp.eq.s32.totalorder %s18, 1
      %p57 = por %p55, %p56
      %p58 = scmp.ne.s32.totalorder %s49, %s50
      %p59 = scmp.eq.s32.totalorder %s18, 0
      %p60 = por %p58, %p59
      %p61 = scmp.ne.s32.totalorder %s49, %s50
      %p62 = scmp.eq.s32.totalorder %s19, 1
      %p63 = por %p61, %p62
      %p65 = scmp.ne.s32.totalorder %s50, %s64
      %p66 = scmp.eq.s32.totalorder %s19, 0
      %p67 = por %p65, %p66
      %s69 = sadd.s32 %s68, 1
      %p72 = scmp.eq.s32.totalorder %s13, 1
      %p73 = scmp.ne.s32.totalorder %s68, %s70
      %p74 = scmp.eq.s32.totalorder %s13, 0
      %p75 = por %p73, %p74
      %p76 = scmp.ne.s32.totalorder %s68, %s70
      %p77 = scmp.eq.s32.totalorder %s18, 1
      %p78 = por %p76, %p77
      %p79 = scmp.ne.s32.totalorder %s70, %s71
      %p80 = scmp.eq.s32.totalorder %s18, 0
      %p81 = por %p79, %p80
      %p82 = scmp.ne.s32.totalorder %s70, %s71
      %p83 = scmp.eq.s32.totalorder %s19, 1
      %p84 = por %p82, %p83
      %p86 = scmp.ne.s32.totalorder %s71, %s85
      %p87 = scmp.eq.s32.totalorder %s19, 0
      %p88 = por %p86, %p87
      %s90 = sadd.s32 %s89, 1
      %p93 = scmp.eq.s32.totalorder %s13, 1
      %p94 = scmp.ne.s32.totalorder %s89, %s91
      %p95 = scmp.eq.s32.totalorder %s13, 0
      %p96 = por %p94, %p95
      %p97 = scmp.ne.s32.totalorder %s89, %s91
      %p98 = scmp.eq.s32.totalorder %s18, 1
      %p99 = por %p97, %p98
      %p100 = scmp.ne.s32.totalorder %s91, %s92
      %p101 = scmp.eq.s32.totalorder %s18, 0
      %p102 = por %p100, %p101
      %p103 = scmp.ne.s32.totalorder %s91, %s92
      %p104 = scmp.eq.s32.totalorder %s19, 1
      %p105 = por %p103, %p104
      %p107 = scmp.ne.s32.totalorder %s92, %s106
      %p108 = scmp.eq.s32.totalorder %s19, 0
      %p109 = por %p107, %p108
      %s111 = sadd.s32 %s110, 1
      %p114 = scmp.eq.s32.totalorder %s13, 1
      %p115 = scmp.ne.s32.totalorder %s110, %s112
      %p116 = scmp.eq.s32.totalorder %s13, 0
      %p117 = por %p115, %p116
      %p118 = scmp.ne.s32.totalorder %s110, %s112
      %p119 = scmp.eq.s32.totalorder %s18, 1
      %p120 = por %p118, %p119
      %p121 = scmp.ne.s32.totalorder %s112, %s113
      %p122 = scmp.eq.s32.totalorder %s18, 0
      %p123 = por %p121, %p122
      %p124 = scmp.ne.s32.totalorder %s112, %s113
      %p125 = scmp.eq.s32.totalorder %s19, 1
      %p126 = por %p124, %p125
      %p128 = scmp.ne.s32.totalorder %s113, %s127
      %p129 = scmp.eq.s32.totalorder %s19, 0
      %p130 = por %p128, %p129
      %s132 = sadd.s32 %s131, 1
      %p135 = scmp.eq.s32.totalorder %s13, 1
      %p136 = scmp.ne.s32.totalorder %s131, %s133
      %p137 = scmp.eq.s32.totalorder %s13, 0
      %p138 = por %p136, %p137
      %p139 = scmp.ne.s32.totalorder %s131, %s133
      %p140 = scmp.eq.s32.totalorder %s18, 1
      %p141 = por %p139, %p140
      %p142 = scmp.ne.s32.totalorder %s133, %s134
      %p143 = scmp.eq.s32.totalorder %s18, 0
      %p144 = por %p142, %p143
      %p145 = scmp.ne.s32.totalorder %s133, %s134
      %p146 = scmp.eq.s32.totalorder %s19, 1
      %p147 = por %p145, %p146
      %p149 = scmp.ne.s32.totalorder %s134, %s148
      %p150 = scmp.eq.s32.totalorder %s19, 0
      %p151 = por %p149, %p150
      %s153 = sadd.s32 %s152, 1
      %p156 = scmp.eq.s32.totalorder %s13, 1
      %p157 = scmp.ne.s32.totalorder %s152, %s154
      %p158 = scmp.eq.s32.totalorder %s13, 0
      %p159 = por %p157, %p158
      %p160 = scmp.ne.s32.totalorder %s152, %s154
      %p161 = scmp.eq.s32.totalorder %s18, 1
      %p162 = por %p160, %p161
      %p163 = scmp.ne.s32.totalorder %s154, %s155
      %p164 = scmp.eq.s32.totalorder %s18, 0
      %p165 = por %p163, %p164
      %p166 = scmp.ne.s32.totalorder %s154, %s155
      %p167 = scmp.eq.s32.totalorder %s19, 1
      %p168 = por %p166, %p167
      %p170 = scmp.ne.s32.totalorder %s155, %s169
      %p171 = scmp.eq.s32.totalorder %s19, 0
      %p172 = por %p170, %p171
      %s173 = ssub.s32 %s13, %s20
      %p174 = scmp.eq.s32.totalorder %s173, 0
      %s176 = sadd.s32 %s175, 1
      %s177 = scalar_select %p174, %s175, %s176
      %p180 = pneg %p174
      %p181 = scmp.eq.s32.totalorder %s13, 1
      %p182 = por %p180, %p181
      %p183 = scmp.ne.s32.totalorder %s175, %s178
      %p184 = scmp.eq.s32.totalorder %s13, 0
      %p185 = por %p183, %p184
      %p186 = scmp.ne.s32.totalorder %s175, %s178
      %p187 = scmp.eq.s32.totalorder %s18, 1
      %p188 = por %p186, %p187
      %p189 = scmp.ne.s32.totalorder %s178, %s179
      %p190 = scmp.eq.s32.totalorder %s18, 0
      %p191 = por %p189, %p190
      %p192 = scmp.ne.s32.totalorder %s178, %s179
      %p193 = scmp.eq.s32.totalorder %s19, 1
      %p194 = por %p192, %p193
      %p196 = scmp.ne.s32.totalorder %s179, %s195
      %p197 = scmp.eq.s32.totalorder %s19, 0
      %p198 = por %p196, %p197
      %p199 = scmp.le.s32.totalorder 1, %s13
      %p200 = scmp.lt.s32.totalorder %s13, 3
      %p201 = pnand %p199, %p200
      %p202 = pneg %p201
      // Predicated region
      $region9: #{_lambda_.1} parent=5 // pred_check
        _
      $region10: #{_lambda_.1} parent=5 // pred_check_branch
        %204 = sbr.rel (%p201) target = $region12
      $region11: #{_lambda_.1} parent=5 // pred_region
        %s205 = ssub.s32 %s13, 1
        // Predicated region
        $region13: #{_lambda_.1} parent=11 // pred_check
          %p206 = pneg %p60
        $region14: #{_lambda_.1} parent=11 // pred_check_branch
          %208 = sbr.rel (%p206) target = $region16
        $region15: #{_lambda_.1} parent=11 // pred_region
          _
        $region16: #{_lambda_.1} parent=11 // pred_fallthru
          _
        // Predicated region
        $region17: #{_lambda_.1} parent=11 // pred_check
          %p209 = pneg %p81
        $region18: #{_lambda_.1} parent=11 // pred_check_branch
          %211 = sbr.rel (%p209) target = $region20
        $region19: #{_lambda_.1} parent=11 // pred_region
          _
        $region20: #{_lambda_.1} parent=11 // pred_fallthru
          _
        // Predicated region
        $region21: #{_lambda_.1} parent=11 // pred_check
          %p212 = pneg %p102
        $region22: #{_lambda_.1} parent=11 // pred_check_branch
          %214 = sbr.rel (%p212) target = $region24
        $region23: #{_lambda_.1} parent=11 // pred_region
          _
        $region24: #{_lambda_.1} parent=11 // pred_fallthru
          _
        // Predicated region
        $region25: #{_lambda_.1} parent=11 // pred_check
          %p215 = pneg %p123
        $region26: #{_lambda_.1} parent=11 // pred_check_branch
          %217 = sbr.rel (%p215) target = $region28
        $region27: #{_lambda_.1} parent=11 // pred_region
          _
        $region28: #{_lambda_.1} parent=11 // pred_fallthru
          _
        // Predicated region
        $region29: #{_lambda_.1} parent=11 // pred_check
          %p218 = pneg %p144
        $region30: #{_lambda_.1} parent=11 // pred_check_branch
          %220 = sbr.rel (%p218) target = $region32
        $region31: #{_lambda_.1} parent=11 // pred_region
          _
        $region32: #{_lambda_.1} parent=11 // pred_fallthru
          _
        // Predicated region
        $region33: #{_lambda_.1} parent=11 // pred_check
          %p221 = pneg %p165
        $region34: #{_lambda_.1} parent=11 // pred_check_branch
          %223 = sbr.rel (%p221) target = $region36
        $region35: #{_lambda_.1} parent=11 // pred_region
          _
        $region36: #{_lambda_.1} parent=11 // pred_fallthru
          _
      $region12: #{_lambda_.1} parent=5 // pred_fallthru
        _
      %p224 = scmp.lt.s32.totalorder %s13, 2
      // Predicated region
      $region37: #{_lambda_.1} parent=5 // pred_check
        %p225 = pneg %p224
      $region38: #{_lambda_.1} parent=5 // pred_check_branch
        %227 = sbr.rel (%p225) target = $region40
      $region39: #{_lambda_.1} parent=5 // pred_region
        // Predicated region
        $region41: #{_lambda_.1} parent=39 // pred_check
          %p228 = pneg %p33
        $region42: #{_lambda_.1} parent=39 // pred_check_branch
          %230 = sbr.rel (%p228) target = $region44
        $region43: #{_lambda_.1} parent=39 // pred_region
          %s231 = smul.u32 13, %s13
          %s232 = ssub.s32 25, %s231
          %p233 = scmp.lt.s32.totalorder %s232, 13
          %s234 = scalar_select %p233, %s232, 13
          %s235 = smul.u32 128, %s234
          %p236 = scmp.lt.s32.totalorder %s231, 24
          %s237 = scalar_select %p236, %s231, 24
          %s238 = smul.addr %s237, 8
          %s239 = scalar_lea.vmem %s0, %s238
          %s240 = smul.u32 13, %s13
          %s241 = ssub.s32 25, %s240
          %p242 = scmp.lt.s32.totalorder %s241, 13
          %s243 = scalar_select %p242, %s241, 13
          %s244 = smul.u32 128, %s243
        $region44: #{_lambda_.1} parent=39 // pred_fallthru
          _
      $region40: #{_lambda_.1} parent=5 // pred_fallthru
        _
      %p245 = scmp.le.s32.totalorder 1, %s13
      %p246 = scmp.lt.s32.totalorder %s13, 3
      %p247 = pnand %p245, %p246
      %p248 = pneg %p247
      // Predicated region
      $region45: #{_lambda_.1} parent=5 // pred_check
        _
      $region46: #{_lambda_.1} parent=5 // pred_check_branch
        %250 = sbr.rel (%p247) target = $region48
      $region47: #{_lambda_.1} parent=5 // pred_region
        %s251 = ssub.s32 %s13, 1
        %s252 = smul.u32 13, %s18
        %s253 = ssub.s32 25, %s252
        %p254 = scmp.lt.s32.totalorder %s253, 13
        %s255 = scalar_select %p254, %s253, 13
        %s256 = smul.u32 128, %s255
        %p257 = scmp.lt.s32.totalorder %s252, 24
        %s258 = scalar_select %p257, %s252, 24
        %s259 = smul.addr %s258, 8
        %s260 = scalar_lea.vmem %s0, %s259
        %p261 = pneg %p39
        %p262 = pneg %p36
        %p263 = pneg %p60
        %p264 = pneg %p57
        %p265 = pneg %p81
        %p266 = pneg %p78
        %p267 = pneg %p102
        %p268 = pneg %p99
        %p269 = pneg %p123
        %p270 = pneg %p120
        %p271 = pneg %p144
        %p272 = pneg %p141
        %p273 = pneg %p165
        %p274 = pneg %p162
        %p275 = pneg %p191
        %p276 = pneg %p188
        %s277 = sand.u32 %s178, 1
        %s278 = sand.u32 %s178, 1
        %s279 = smul.addr %s278, 104
        %s280 = scalar_lea.vmem [#allocation2], %s279
        %s281 = smul.u32 13, %s18
        %s282 = ssub.s32 25, %s281
        %p283 = scmp.lt.s32.totalorder %s282, 13
        %s284 = scalar_select %p283, %s282, 13
        %s285 = smul.u32 128, %s284
        %p286 = scmp.lt.s32.totalorder %s281, 24
        %s287 = scalar_select %p286, %s281, 24
        %s288 = smul.addr %s287, 8
        %s289 = scalar_lea.vmem %s0, %s288
        %s290 = smul.u32 13, %s18
        %s291 = ssub.s32 25, %s290
        %p292 = scmp.lt.s32.totalorder %s291, 13
        %s293 = scalar_select %p292, %s291, 13
        %s294 = smul.u32 128, %s293
        %s295 = smul.u32 13, %s18
        %s296 = ssub.s32 25, %s295
        %p297 = scmp.lt.s32.totalorder %s296, 13
        %s298 = scalar_select %p297, %s296, 13
        %s299 = smul.u32 128, %s298
        %v301 = vld [vmem:[%s289] sm:$0xff]
        %v302 = vld [vmem:[%s289 + $0x8] sm:$0xff]
        %v303 = vld [vmem:[%s289 + $0x10] sm:$0xff]
        %v304 = vld [vmem:[%s289 + $0x18] sm:$0xff]
        %v305 = vld [vmem:[%s289 + $0x20] sm:$0xff]
        %v306 = vld [vmem:[%s289 + $0x28] sm:$0xff]
        %v307 = vld [vmem:[%s289 + $0x30] sm:$0xff]
        %v308 = vld [vmem:[%s289 + $0x38] sm:$0xff]
        %v309 = vld [vmem:[%s289 + $0x40] sm:$0xff]
        %v310 = vld [vmem:[%s289 + $0x48] sm:$0xff]
        %v311 = vld [vmem:[%s289 + $0x50] sm:$0xff]
        %v312 = vld [vmem:[%s289 + $0x58] sm:$0xff]
        %v313 = vld [vmem:[%s289 + $0x60] sm:$0xff]
        %v314 = vpack.c.bf16 %v302, %v301
        %v315 = vpack.c.bf16 %v304, %v303
        %v316 = vpack.c.bf16 %v306, %v305
        %v317 = vpack.c.bf16 %v308, %v307
        %v318 = vpack.c.bf16 %v310, %v309
        %v319 = vpack.c.bf16 %v312, %v311
        %v320 = vpack.c.bf16 %v313, %v313
        %v321 = vld [vmem:[%s1] sm:$0xff]
        %v322 = vld [vmem:[%s1 + $0x8] sm:$0xff]
        %v323 = vld [vmem:[%s1 + $0x10] sm:$0xff]
        %v324 = vld [vmem:[%s1 + $0x18] sm:$0xff]
        %v325 = vld [vmem:[%s1 + $0x20] sm:$0xff]
        %v326 = vld [vmem:[%s1 + $0x28] sm:$0xff]
        %v327 = vld [vmem:[%s1 + $0x30] sm:$0xff]
        %v328 = vld [vmem:[%s1 + $0x38] sm:$0xff]
        %v329 = vld [vmem:[%s1 + $0x40] sm:$0xff]
        %v330 = vld [vmem:[%s1 + $0x48] sm:$0xff]
        %v331 = vld [vmem:[%s1 + $0x50] sm:$0xff]
        %v332 = vld [vmem:[%s1 + $0x58] sm:$0xff]
        %v333 = vld [vmem:[%s1 + $0x60] sm:$0xff]
        %v334 = vld [vmem:[%s1 + $0x68] sm:$0xff]
        %v335 = vld [vmem:[%s1 + $0x70] sm:$0xff]
        %v336 = vld [vmem:[%s1 + $0x78] sm:$0xff]
        %v337 = vld [vmem:[%s1 + $0x80] sm:$0xff]
        %v338 = vld [vmem:[%s1 + $0x88] sm:$0xff]
        %v339 = vld [vmem:[%s1 + $0x90] sm:$0xff]
        %v340 = vld [vmem:[%s1 + $0x98] sm:$0xff]
        %v341 = vld [vmem:[%s1 + $0xa0] sm:$0xff]
        %v342 = vld [vmem:[%s1 + $0xa8] sm:$0xff]
        %v343 = vld [vmem:[%s1 + $0xb0] sm:$0xff]
        %v344 = vld [vmem:[%s1 + $0xb8] sm:$0xff]
        %v345 = vld [vmem:[%s1 + $0xc0] sm:$0xff]
        %v346 = vld [vmem:[%s1 + $0xc8] sm:$0xff]
        %v347 = vld [vmem:[%s1 + $0xd0] sm:$0xff]
        %v348 = vld [vmem:[%s1 + $0xd8] sm:$0xff]
        %v349 = vld [vmem:[%s1 + $0xe0] sm:$0xff]
        %v350 = vld [vmem:[%s1 + $0xe8] sm:$0xff]
        %v351 = vld [vmem:[%s1 + $0xf0] sm:$0xff]
        %v352 = vld [vmem:[%s1 + $0xf8] sm:$0xff]
        %v353 = vld [vmem:[%s2] sm:$0xf]
        %v355 = vlaneseq
        %v356 = vshrl.u32 %v355, 7
        %v357 = vsub.s32 0, %v356
        %v358 = vrot.slane %v353, %v357
        %v359 = vlaneseq
        %v360 = vshrl.u32 %v359, 7
        %v361 = vsub.s32 1, %v360
        %v362 = vrot.slane %v353, %v361
        %v363 = vlaneseq
        %v364 = vshrl.u32 %v363, 7
        %v365 = vsub.s32 2, %v364
        %v366 = vrot.slane %v353, %v365
        %v367 = vlaneseq
        %v368 = vshrl.u32 %v367, 7
        %v369 = vsub.s32 3, %v368
        %v370 = vrot.slane %v353, %v369
        %v407 = vunpack.c.l.b16 %v321
        %v408 = vunpack.c.h.b16 %v321
        %v409 = vunpack.c.l.b16 %v322
        %v410 = vunpack.c.h.b16 %v322
        %v411 = vunpack.c.l.b16 %v323
        %v412 = vunpack.c.h.b16 %v323
        %v413 = vunpack.c.l.b16 %v324
        %v414 = vunpack.c.h.b16 %v324
        %v415 = vunpack.c.l.b16 %v325
        %v416 = vunpack.c.h.b16 %v325
        %v417 = vunpack.c.l.b16 %v326
        %v418 = vunpack.c.h.b16 %v326
        %v419 = vunpack.c.l.b16 %v327
        %v420 = vunpack.c.h.b16 %v327
        %v421 = vunpack.c.l.b16 %v328
        %v422 = vunpack.c.h.b16 %v328
        %v423 = vunpack.c.l.b16 %v329
        %v424 = vunpack.c.h.b16 %v329
        %v425 = vunpack.c.l.b16 %v330
        %v426 = vunpack.c.h.b16 %v330
        %v427 = vunpack.c.l.b16 %v331
        %v428 = vunpack.c.h.b16 %v331
        %v429 = vunpack.c.l.b16 %v332
        %v430 = vunpack.c.h.b16 %v332
        %v431 = vunpack.c.l.b16 %v333
        %v432 = vunpack.c.h.b16 %v333
        %v433 = vunpack.c.l.b16 %v334
        %v434 = vunpack.c.h.b16 %v334
        %v435 = vunpack.c.l.b16 %v335
        %v436 = vunpack.c.h.b16 %v335
        %v437 = vunpack.c.l.b16 %v336
        %v438 = vunpack.c.h.b16 %v336
        %v439 = vunpack.c.l.b16 %v337
        %v440 = vunpack.c.h.b16 %v337
        %v441 = vunpack.c.l.b16 %v338
        %v442 = vunpack.c.h.b16 %v338
        %v443 = vunpack.c.l.b16 %v339
        %v444 = vunpack.c.h.b16 %v339
        %v445 = vunpack.c.l.b16 %v340
        %v446 = vunpack.c.h.b16 %v340
        %v447 = vunpack.c.l.b16 %v341
        %v448 = vunpack.c.h.b16 %v341
        %v449 = vunpack.c.l.b16 %v342
        %v450 = vunpack.c.h.b16 %v342
        %v451 = vunpack.c.l.b16 %v343
        %v452 = vunpack.c.h.b16 %v343
        %v453 = vunpack.c.l.b16 %v344
        %v454 = vunpack.c.h.b16 %v344
        %v455 = vunpack.c.l.b16 %v345
        %v456 = vunpack.c.h.b16 %v345
        %v457 = vunpack.c.l.b16 %v346
        %v458 = vunpack.c.h.b16 %v346
        %v459 = vunpack.c.l.b16 %v347
        %v460 = vunpack.c.h.b16 %v347
        %v461 = vunpack.c.l.b16 %v348
        %v462 = vunpack.c.h.b16 %v348
        %v463 = vunpack.c.l.b16 %v349
        %v464 = vunpack.c.h.b16 %v349
        %v465 = vunpack.c.l.b16 %v350
        %v466 = vunpack.c.h.b16 %v350
        %v467 = vunpack.c.l.b16 %v351
        %v468 = vunpack.c.h.b16 %v351
        %v469 = vunpack.c.l.b16 %v352
        %v470 = vunpack.c.h.b16 %v352
        %v471 = vpack.c.b16 %v411, %v407
        %v472 = vpack.c.b16 %v412, %v408
        %v473 = vpack.c.b16 %v413, %v409
        %v474 = vpack.c.b16 %v414, %v410
        %v475 = vpack.c.b16 %v419, %v415
        %v476 = vpack.c.b16 %v420, %v416
        %v477 = vpack.c.b16 %v421, %v417
        %v478 = vpack.c.b16 %v422, %v418
        %v479 = vpack.c.b16 %v427, %v423
        %v480 = vpack.c.b16 %v428, %v424
        %v481 = vpack.c.b16 %v429, %v425
        %v482 = vpack.c.b16 %v430, %v426
        %v483 = vpack.c.b16 %v435, %v431
        %v484 = vpack.c.b16 %v436, %v432
        %v485 = vpack.c.b16 %v437, %v433
        %v486 = vpack.c.b16 %v438, %v434
        %v487 = vpack.c.b16 %v443, %v439
        %v488 = vpack.c.b16 %v444, %v440
        %v489 = vpack.c.b16 %v445, %v441
        %v490 = vpack.c.b16 %v446, %v442
        %v491 = vpack.c.b16 %v451, %v447
        %v492 = vpack.c.b16 %v452, %v448
        %v493 = vpack.c.b16 %v453, %v449
        %v494 = vpack.c.b16 %v454, %v450
        %v495 = vpack.c.b16 %v459, %v455
        %v496 = vpack.c.b16 %v460, %v456
        %v497 = vpack.c.b16 %v461, %v457
        %v498 = vpack.c.b16 %v462, %v458
        %v499 = vpack.c.b16 %v467, %v463
        %v500 = vpack.c.b16 %v468, %v464
        %v501 = vpack.c.b16 %v469, %v465
        %v502 = vpack.c.b16 %v470, %v466
        %535 = vmatprep.subr.bf16.mxu0 %v472
        %536 = vmatpush1.bf16.msra.mxu0 %v471
        %537 = vmatprep.subr.bf16.mxu0 %v476
        %538 = vmatpush1.bf16.msra.mxu0 %v475
        %539 = vmatprep.subr.bf16.mxu0 %v480
        %540 = vmatpush1.bf16.msra.mxu0 %v479
        %541 = vmatprep.subr.bf16.mxu0 %v484
        %542 = vmatpush1.bf16.msra.mxu0 %v483
        %543 = vmatprep.subr.bf16.mxu0 %v488
        %544 = vmatpush1.bf16.msra.mxu0 %v487
        %545 = vmatprep.subr.bf16.mxu0 %v492
        %546 = vmatpush1.bf16.msra.mxu0 %v491
        %547 = vmatprep.subr.bf16.mxu0 %v496
        %548 = vmatpush1.bf16.msra.mxu0 %v495
        %549 = vmatprep.subr.bf16.mxu0 %v500
        %550 = vmatpush1.bf16.msra.mxu0 %v499
        %551 = vmatprep.subr.bf16.mxu0 0
        %552 = vmatpush1.bf16.msra.mxu0 0
        %553 = vmatprep.subr.bf16.mxu0 0
        %554 = vmatpush1.bf16.msra.mxu0 0
        %555 = vmatprep.subr.bf16.mxu0 0
        %556 = vmatpush1.bf16.msra.mxu0 0
        %557 = vmatprep.subr.bf16.mxu0 0
        %558 = vmatpush1.bf16.msra.mxu0 0
        %559 = vmatprep.subr.bf16.mxu0 0
        %560 = vmatpush1.bf16.msra.mxu0 0
        %561 = vmatprep.subr.bf16.mxu0 0
        %562 = vmatpush1.bf16.msra.mxu0 0
        %563 = vmatprep.subr.bf16.mxu0 0
        %564 = vmatpush1.bf16.msra.mxu0 0
        %565 = vmatprep.subr.bf16.mxu0 0
        %566 = vmatpush1.bf16.msra.mxu0 0
        %567 = vmatprep.mubr.bf16.mxu0 0
        %568 = vmatmul.mubr.bf16.gmra.mrb[0].mxu0 %v314
        %v569 = vpop.f32.mrb[0].mxu0
        %v570 = vadd.f32 %v358, %v569
        %v571 = vpop.f32.mrb[0].mxu0
        %v572 = vadd.f32 %v362, %v571
        %v573 = vpop.f32.mrb[0].mxu0
        %v574 = vadd.f32 %v358, %v573
        %v575 = vpop.f32.mrb[0].mxu0
        %v576 = vadd.f32 %v362, %v575
        %577 = vmatprep.mubr.bf16.mxu0 0
        %578 = vmatmul.mubr.bf16.gmra.mrb[0].mxu0 %v315
        %v579 = vpop.f32.mrb[0].mxu0
        %v580 = vadd.f32 %v358, %v579
        %v581 = vpop.f32.mrb[0].mxu0
        %v582 = vadd.f32 %v362, %v581
        %v583 = vpop.f32.mrb[0].mxu0
        %v584 = vadd.f32 %v358, %v583
        %v585 = vpop.f32.mrb[0].mxu0
        %v586 = vadd.f32 %v362, %v585
        %587 = vmatprep.mubr.bf16.mxu0 0
        %588 = vmatmul.mubr.bf16.gmra.mrb[0].mxu0 %v316
        %v589 = vpop.f32.mrb[0].mxu0
        %v590 = vadd.f32 %v358, %v589
        %v591 = vpop.f32.mrb[0].mxu0
        %v592 = vadd.f32 %v362, %v591
        %v593 = vpop.f32.mrb[0].mxu0
        %v594 = vadd.f32 %v358, %v593
        %v595 = vpop.f32.mrb[0].mxu0
        %v596 = vadd.f32 %v362, %v595
        %597 = vmatprep.mubr.bf16.mxu0 0
        %598 = vmatmul.mubr.bf16.gmra.mrb[0].mxu0 %v317
        %v599 = vpop.f32.mrb[0].mxu0
        %v600 = vadd.f32 %v358, %v599
        %v601 = vpop.f32.mrb[0].mxu0
        %v602 = vadd.f32 %v362, %v601
        %v603 = vpop.f32.mrb[0].mxu0
        %v604 = vadd.f32 %v358, %v603
        %v605 = vpop.f32.mrb[0].mxu0
        %v606 = vadd.f32 %v362, %v605
        %607 = vmatprep.mubr.bf16.mxu0 0
        %608 = vmatmul.mubr.bf16.gmra.mrb[0].mxu0 %v318
        %v609 = vpop.f32.mrb[0].mxu0
        %v610 = vadd.f32 %v358, %v609
        %v611 = vpop.f32.mrb[0].mxu0
        %v612 = vadd.f32 %v362, %v611
        %v613 = vpop.f32.mrb[0].mxu0
        %v614 = vadd.f32 %v358, %v613
        %v615 = vpop.f32.mrb[0].mxu0
        %v616 = vadd.f32 %v362, %v615
        %617 = vmatprep.mubr.bf16.mxu0 0
        %618 = vmatmul.mubr.bf16.gmra.mrb[0].mxu0 %v319
        %v619 = vpop.f32.mrb[0].mxu0
        %v620 = vadd.f32 %v358, %v619
        %v621 = vpop.f32.mrb[0].mxu0
        %v622 = vadd.f32 %v362, %v621
        %v623 = vpop.f32.mrb[0].mxu0
        %v624 = vadd.f32 %v358, %v623
        %v625 = vpop.f32.mrb[0].mxu0
        %v626 = vadd.f32 %v362, %v625
        %627 = vmatprep.mubr.bf16.mxu0 0
        %628 = vmatmul.mubr.bf16.gmra.mrb[0].mxu0 %v320
        %v629 = vpop.f32.mrb[0].mxu0
        %v630 = vadd.f32 %v358, %v629
        %v631 = vpop.f32.mrb[0].mxu0
        %v632 = vadd.f32 %v362, %v631
        %v633 = vpop.f32.mrb[0].mxu0
        %v634 = vpop.f32.mrb[0].mxu0
        %635 = vdwg.mxu0
        %636 = vmatprep.subr.bf16.mxu0 %v474
        %637 = vmatpush1.bf16.msra.mxu0 %v473
        %638 = vmatprep.subr.bf16.mxu0 %v478
        %639 = vmatpush1.bf16.msra.mxu0 %v477
        %640 = vmatprep.subr.bf16.mxu0 %v482
        %641 = vmatpush1.bf16.msra.mxu0 %v481
        %642 = vmatprep.subr.bf16.mxu0 %v486
        %643 = vmatpush1.bf16.msra.mxu0 %v485
        %644 = vmatprep.subr.bf16.mxu0 %v490
        %645 = vmatpush1.bf16.msra.mxu0 %v489
        %646 = vmatprep.subr.bf16.mxu0 %v494
        %647 = vmatpush1.bf16.msra.mxu0 %v493
        %648 = vmatprep.subr.bf16.mxu0 %v498
        %649 = vmatpush1.bf16.msra.mxu0 %v497
        %650 = vmatprep.subr.bf16.mxu0 %v502
        %651 = vmatpush1.bf16.msra.mxu0 %v501
        %652 = vmatprep.subr.bf16.mxu0 0
        %653 = vmatpush1.bf16.msra.mxu0 0
        %654 = vmatprep.subr.bf16.mxu0 0
        %655 = vmatpush1.bf16.msra.mxu0 0
        %656 = vmatprep.subr.bf16.mxu0 0
        %657 = vmatpush1.bf16.msra.mxu0 0
        %658 = vmatprep.subr.bf16.mxu0 0
        %659 = vmatpush1.bf16.msra.mxu0 0
        %660 = vmatprep.subr.bf16.mxu0 0
        %661 = vmatpush1.bf16.msra.mxu0 0
        %662 = vmatprep.subr.bf16.mxu0 0
        %663 = vmatpush1.bf16.msra.mxu0 0
        %664 = vmatprep.subr.bf16.mxu0 0
        %665 = vmatpush1.bf16.msra.mxu0 0
        %666 = vmatprep.subr.bf16.mxu0 0
        %667 = vmatpush1.bf16.msra.mxu0 0
        %668 = vmatprep.mubr.bf16.mxu0 0
        %669 = vmatmul.mubr.bf16.gmra.mrb[0].mxu0 %v314
        %v670 = vpop.f32.mrb[0].mxu0
        %v671 = vadd.f32 %v366, %v670
        %v672 = vpop.f32.mrb[0].mxu0
        %v673 = vadd.f32 %v370, %v672
        %v674 = vpop.f32.mrb[0].mxu0
        %v675 = vadd.f32 %v366, %v674
        %v676 = vpop.f32.mrb[0].mxu0
        %v677 = vadd.f32 %v370, %v676
        %678 = vmatprep.mubr.bf16.mxu0 0
        %679 = vmatmul.mubr.bf16.gmra.mrb[0].mxu0 %v315
        %v680 = vpop.f32.mrb[0].mxu0
        %v681 = vadd.f32 %v366, %v680
        %v682 = vpop.f32.mrb[0].mxu0
        %v683 = vadd.f32 %v370, %v682
        %v684 = vpop.f32.mrb[0].mxu0
        %v685 = vadd.f32 %v366, %v684
        %v686 = vpop.f32.mrb[0].mxu0
        %v687 = vadd.f32 %v370, %v686
        %688 = vmatprep.mubr.bf16.mxu0 0
        %689 = vmatmul.mubr.bf16.gmra.mrb[0].mxu0 %v316
        %v690 = vpop.f32.mrb[0].mxu0
        %v691 = vadd.f32 %v366, %v690
        %v692 = vpop.f32.mrb[0].mxu0
        %v693 = vadd.f32 %v370, %v692
        %v694 = vpop.f32.mrb[0].mxu0
        %v695 = vadd.f32 %v366, %v694
        %v696 = vpop.f32.mrb[0].mxu0
        %v697 = vadd.f32 %v370, %v696
        %698 = vmatprep.mubr.bf16.mxu0 0
        %699 = vmatmul.mubr.bf16.gmra.mrb[0].mxu0 %v317
        %v700 = vpop.f32.mrb[0].mxu0
        %v701 = vadd.f32 %v366, %v700
        %v702 = vpop.f32.mrb[0].mxu0
        %v703 = vadd.f32 %v370, %v702
        %v704 = vpop.f32.mrb[0].mxu0
        %v705 = vadd.f32 %v366, %v704
        %v706 = vpop.f32.mrb[0].mxu0
        %v707 = vadd.f32 %v370, %v706
        %708 = vmatprep.mubr.bf16.mxu0 0
        %709 = vmatmul.mubr.bf16.gmra.mrb[0].mxu0 %v318
        %v710 = vpop.f32.mrb[0].mxu0
        %v711 = vadd.f32 %v366, %v710
        %v712 = vpop.f32.mrb[0].mxu0
        %v713 = vadd.f32 %v370, %v712
        %v714 = vpop.f32.mrb[0].mxu0
        %v715 = vadd.f32 %v366, %v714
        %v716 = vpop.f32.mrb[0].mxu0
        %v717 = vadd.f32 %v370, %v716
        %718 = vmatprep.mubr.bf16.mxu0 0
        %719 = vmatmul.mubr.bf16.gmra.mrb[0].mxu0 %v319
        %v720 = vpop.f32.mrb[0].mxu0
        %v721 = vadd.f32 %v366, %v720
        %v722 = vpop.f32.mrb[0].mxu0
        %v723 = vadd.f32 %v370, %v722
        %v724 = vpop.f32.mrb[0].mxu0
        %v725 = vadd.f32 %v366, %v724
        %v726 = vpop.f32.mrb[0].mxu0
        %v727 = vadd.f32 %v370, %v726
        %728 = vmatprep.mubr.bf16.mxu0 0
        %729 = vmatmul.mubr.bf16.gmra.mrb[0].mxu0 %v320
        %v730 = vpop.f32.mrb[0].mxu0
        %v731 = vadd.f32 %v366, %v730
        %v732 = vpop.f32.mrb[0].mxu0
        %v733 = vadd.f32 %v370, %v732
        %v734 = vpop.f32.mrb[0].mxu0
        %v735 = vpop.f32.mrb[0].mxu0
        %736 = vdwg.mxu0
        %v737 = vmax.f32 %v570, 0.0
        %v738 = vmax.f32 %v572, 0.0
        %v739 = vmax.f32 %v671, 0.0
        %v740 = vmax.f32 %v673, 0.0
        %v741 = vmax.f32 %v574, 0.0
        %v742 = vmax.f32 %v576, 0.0
        %v743 = vmax.f32 %v675, 0.0
        %v744 = vmax.f32 %v677, 0.0
        %v745 = vmax.f32 %v580, 0.0
        %v746 = vmax.f32 %v582, 0.0
        %v747 = vmax.f32 %v681, 0.0
        %v748 = vmax.f32 %v683, 0.0
        %v749 = vmax.f32 %v584, 0.0
        %v750 = vmax.f32 %v586, 0.0
        %v751 = vmax.f32 %v685, 0.0
        %v752 = vmax.f32 %v687, 0.0
        %v753 = vmax.f32 %v590, 0.0
        %v754 = vmax.f32 %v592, 0.0
        %v755 = vmax.f32 %v691, 0.0
        %v756 = vmax.f32 %v693, 0.0
        %v757 = vmax.f32 %v594, 0.0
        %v758 = vmax.f32 %v596, 0.0
        %v759 = vmax.f32 %v695, 0.0
        %v760 = vmax.f32 %v697, 0.0
        %v761 = vmax.f32 %v600, 0.0
        %v762 = vmax.f32 %v602, 0.0
        %v763 = vmax.f32 %v701, 0.0
        %v764 = vmax.f32 %v703, 0.0
        %v765 = vmax.f32 %v604, 0.0
        %v766 = vmax.f32 %v606, 0.0
        %v767 = vmax.f32 %v705, 0.0
        %v768 = vmax.f32 %v707, 0.0
        %v769 = vmax.f32 %v610, 0.0
        %v770 = vmax.f32 %v612, 0.0
        %v771 = vmax.f32 %v711, 0.0
        %v772 = vmax.f32 %v713, 0.0
        %v773 = vmax.f32 %v614, 0.0
        %v774 = vmax.f32 %v616, 0.0
        %v775 = vmax.f32 %v715, 0.0
        %v776 = vmax.f32 %v717, 0.0
        %v777 = vmax.f32 %v620, 0.0
        %v778 = vmax.f32 %v622, 0.0
        %v779 = vmax.f32 %v721, 0.0
        %v780 = vmax.f32 %v723, 0.0
        %v781 = vmax.f32 %v624, 0.0
        %v782 = vmax.f32 %v626, 0.0
        %v783 = vmax.f32 %v725, 0.0
        %v784 = vmax.f32 %v727, 0.0
        %v785 = vmax.f32 %v630, 0.0
        %v786 = vmax.f32 %v632, 0.0
        %v787 = vmax.f32 %v731, 0.0
        %v788 = vmax.f32 %v733, 0.0
        %v789 = vpack.c.bf16 %v741, %v737
        %v790 = vpack.c.bf16 %v742, %v738
        %v791 = vpack.c.bf16 %v743, %v739
        %v792 = vpack.c.bf16 %v744, %v740
        %v793 = vpack.c.bf16 %v749, %v745
        %v794 = vpack.c.bf16 %v750, %v746
        %v795 = vpack.c.bf16 %v751, %v747
        %v796 = vpack.c.bf16 %v752, %v748
        %v797 = vpack.c.bf16 %v757, %v753
        %v798 = vpack.c.bf16 %v758, %v754
        %v799 = vpack.c.bf16 %v759, %v755
        %v800 = vpack.c.bf16 %v760, %v756
        %v801 = vpack.c.bf16 %v765, %v761
        %v802 = vpack.c.bf16 %v766, %v762
        %v803 = vpack.c.bf16 %v767, %v763
        %v804 = vpack.c.bf16 %v768, %v764
        %v805 = vpack.c.bf16 %v773, %v769
        %v806 = vpack.c.bf16 %v774, %v770
        %v807 = vpack.c.bf16 %v775, %v771
        %v808 = vpack.c.bf16 %v776, %v772
        %v809 = vpack.c.bf16 %v781, %v777
        %v810 = vpack.c.bf16 %v782, %v778
        %v811 = vpack.c.bf16 %v783, %v779
        %v812 = vpack.c.bf16 %v784, %v780
        %v813 = vpack.c.bf16 %v785, %v785
        %v814 = vpack.c.bf16 %v786, %v786
        %v815 = vpack.c.bf16 %v787, %v787
        %v816 = vpack.c.bf16 %v788, %v788
        %v817 = vld [vmem:[%s3] sm:$0xff]
        %v818 = vld [vmem:[%s3 + $0x8] sm:$0xf]
        %v819 = vld [vmem:[%s3 + $0xc] sm:$0xff]
        %v820 = vld [vmem:[%s3 + $0x14] sm:$0xf]
        %v821 = vld [vmem:[%s3 + $0x18] sm:$0xff]
        %v822 = vld [vmem:[%s3 + $0x20] sm:$0xf]
        %v823 = vld [vmem:[%s3 + $0x24] sm:$0xff]
        %v824 = vld [vmem:[%s3 + $0x2c] sm:$0xf]
        %v825 = vld [vmem:[%s3 + $0x30] sm:$0xff]
        %v826 = vld [vmem:[%s3 + $0x38] sm:$0xf]
        %v827 = vld [vmem:[%s3 + $0x3c] sm:$0xff]
        %v828 = vld [vmem:[%s3 + $0x44] sm:$0xf]
        %v829 = vld [vmem:[%s3 + $0x48] sm:$0xff]
        %v830 = vld [vmem:[%s3 + $0x50] sm:$0xf]
        %v831 = vld [vmem:[%s3 + $0x54] sm:$0xff]
        %v832 = vld [vmem:[%s3 + $0x5c] sm:$0xf]
        %v833 = vld [vmem:[%s3 + $0x60] sm:$0xff]
        %v834 = vld [vmem:[%s3 + $0x68] sm:$0xf]
        %v835 = vld [vmem:[%s3 + $0x6c] sm:$0xff]
        %v836 = vld [vmem:[%s3 + $0x74] sm:$0xf]
        %v837 = vld [vmem:[%s3 + $0x78] sm:$0xff]
        %v838 = vld [vmem:[%s3 + $0x80] sm:$0xf]
        %v839 = vld [vmem:[%s3 + $0x84] sm:$0xff]
        %v840 = vld [vmem:[%s3 + $0x8c] sm:$0xf]
        %v841 = vld [vmem:[%s3 + $0x90] sm:$0xff]
        %v842 = vld [vmem:[%s3 + $0x98] sm:$0xf]
        %v843 = vld [vmem:[%s3 + $0x9c] sm:$0xff]
        %v844 = vld [vmem:[%s3 + $0xa4] sm:$0xf]
        %v845 = vld [vmem:[%s3 + $0xa8] sm:$0xff]
        %v846 = vld [vmem:[%s3 + $0xb0] sm:$0xf]
        %v847 = vld [vmem:[%s3 + $0xb4] sm:$0xff]
        %v848 = vld [vmem:[%s3 + $0xbc] sm:$0xf]
        %v849 = vld [vmem:[%s3 + $0xc0] sm:$0xff]
        %v850 = vld [vmem:[%s3 + $0xc8] sm:$0xf]
        %v851 = vld [vmem:[%s3 + $0xcc] sm:$0xff]
        %v852 = vld [vmem:[%s3 + $0xd4] sm:$0xf]
        %v853 = vld [vmem:[%s3 + $0xd8] sm:$0xff]
        %v854 = vld [vmem:[%s3 + $0xe0] sm:$0xf]
        %v855 = vld [vmem:[%s3 + $0xe4] sm:$0xff]
        %v856 = vld [vmem:[%s3 + $0xec] sm:$0xf]
        %v857 = vld [vmem:[%s3 + $0xf0] sm:$0xff]
        %v858 = vld [vmem:[%s3 + $0xf8] sm:$0xf]
        %v859 = vld [vmem:[%s3 + $0xfc] sm:$0xff]
        %v860 = vld [vmem:[%s3 + $0x104] sm:$0xf]
        %v861 = vld [vmem:[%s3 + $0x108] sm:$0xff]
        %v862 = vld [vmem:[%s3 + $0x110] sm:$0xf]
        %v863 = vld [vmem:[%s3 + $0x114] sm:$0xff]
        %v864 = vld [vmem:[%s3 + $0x11c] sm:$0xf]
        %v865 = vld [vmem:[%s3 + $0x120] sm:$0xff]
        %v866 = vld [vmem:[%s3 + $0x128] sm:$0xf]
        %v867 = vld [vmem:[%s3 + $0x12c] sm:$0xff]
        %v868 = vld [vmem:[%s3 + $0x134] sm:$0xf]
        %v869 = vld [vmem:[%s3 + $0x138] sm:$0xff]
        %v870 = vld [vmem:[%s3 + $0x140] sm:$0xf]
        %v871 = vld [vmem:[%s3 + $0x144] sm:$0xff]
        %v872 = vld [vmem:[%s3 + $0x14c] sm:$0xf]
        %v873 = vld [vmem:[%s3 + $0x150] sm:$0xff]
        %v874 = vld [vmem:[%s3 + $0x158] sm:$0xf]
        %v875 = vld [vmem:[%s3 + $0x15c] sm:$0xff]
        %v876 = vld [vmem:[%s3 + $0x164] sm:$0xf]
        %v877 = vld [vmem:[%s3 + $0x168] sm:$0xff]
        %v878 = vld [vmem:[%s3 + $0x170] sm:$0xf]
        %v879 = vld [vmem:[%s3 + $0x174] sm:$0xff]
        %v880 = vld [vmem:[%s3 + $0x17c] sm:$0xf]
        %v881 = vld [vmem:[%s3 + $0x180] sm:$0xff]
        %v882 = vld [vmem:[%s3 + $0x188] sm:$0xf]
        %v883 = vld [vmem:[%s3 + $0x18c] sm:$0xff]
        %v884 = vld [vmem:[%s3 + $0x194] sm:$0xf]
        %v885 = vld [vmem:[%s3 + $0x198] sm:$0xff]
        %v886 = vld [vmem:[%s3 + $0x1a0] sm:$0xf]
        %v887 = vld [vmem:[%s3 + $0x1a4] sm:$0xff]
        %v888 = vld [vmem:[%s3 + $0x1ac] sm:$0xf]
        %v889 = vld [vmem:[%s3 + $0x1b0] sm:$0xff]
        %v890 = vld [vmem:[%s3 + $0x1b8] sm:$0xf]
        %v891 = vld [vmem:[%s3 + $0x1bc] sm:$0xff]
        %v892 = vld [vmem:[%s3 + $0x1c4] sm:$0xf]
        %v893 = vld [vmem:[%s3 + $0x1c8] sm:$0xff]
        %v894 = vld [vmem:[%s3 + $0x1d0] sm:$0xf]
        %v895 = vld [vmem:[%s3 + $0x1d4] sm:$0xff]
        %v896 = vld [vmem:[%s3 + $0x1dc] sm:$0xf]
        %v897 = vld [vmem:[%s3 + $0x1e0] sm:$0xff]
        %v898 = vld [vmem:[%s3 + $0x1e8] sm:$0xf]
        %v899 = vld [vmem:[%s3 + $0x1ec] sm:$0xff]
        %v900 = vld [vmem:[%s3 + $0x1f4] sm:$0xf]
        %v901 = vld [vmem:[%s3 + $0x1f8] sm:$0xff]
        %v902 = vld [vmem:[%s3 + $0x200] sm:$0xf]
        %v903 = vld [vmem:[%s3 + $0x204] sm:$0xff]
        %v904 = vld [vmem:[%s3 + $0x20c] sm:$0xf]
        %v905 = vld [vmem:[%s3 + $0x210] sm:$0xff]
        %v906 = vld [vmem:[%s3 + $0x218] sm:$0xf]
        %v907 = vld [vmem:[%s3 + $0x21c] sm:$0xff]
        %v908 = vld [vmem:[%s3 + $0x224] sm:$0xf]
        %v909 = vld [vmem:[%s3 + $0x228] sm:$0xff]
        %v910 = vld [vmem:[%s3 + $0x230] sm:$0xf]
        %v911 = vld [vmem:[%s3 + $0x234] sm:$0xff]
        %v912 = vld [vmem:[%s3 + $0x23c] sm:$0xf]
        %v913 = vld [vmem:[%s3 + $0x240] sm:$0xff]
        %v914 = vld [vmem:[%s3 + $0x248] sm:$0xf]
        %v915 = vld [vmem:[%s3 + $0x24c] sm:$0xff]
        %v916 = vld [vmem:[%s3 + $0x254] sm:$0xf]
        %v917 = vld [vmem:[%s3 + $0x258] sm:$0xff]
        %v918 = vld [vmem:[%s3 + $0x260] sm:$0xf]
        %v919 = vld [vmem:[%s3 + $0x264] sm:$0xff]
        %v920 = vld [vmem:[%s3 + $0x26c] sm:$0xf]
        %v921 = vld [vmem:[%s3 + $0x270] sm:$0xff]
        %v922 = vld [vmem:[%s3 + $0x278] sm:$0xf]
        %v923 = vld [vmem:[%s3 + $0x27c] sm:$0xff]
        %v924 = vld [vmem:[%s3 + $0x284] sm:$0xf]
        %v925 = vld [vmem:[%s3 + $0x288] sm:$0xff]
        %v926 = vld [vmem:[%s3 + $0x290] sm:$0xf]
        %v927 = vld [vmem:[%s3 + $0x294] sm:$0xff]
        %v928 = vld [vmem:[%s3 + $0x29c] sm:$0xf]
        %v929 = vld [vmem:[%s3 + $0x2a0] sm:$0xff]
        %v930 = vld [vmem:[%s3 + $0x2a8] sm:$0xf]
        %v931 = vld [vmem:[%s3 + $0x2ac] sm:$0xff]
        %v932 = vld [vmem:[%s3 + $0x2b4] sm:$0xf]
        %v933 = vld [vmem:[%s3 + $0x2b8] sm:$0xff]
        %v934 = vld [vmem:[%s3 + $0x2c0] sm:$0xf]
        %v935 = vld [vmem:[%s3 + $0x2c4] sm:$0xff]
        %v936 = vld [vmem:[%s3 + $0x2cc] sm:$0xf]
        %v937 = vld [vmem:[%s3 + $0x2d0] sm:$0xff]
        %v938 = vld [vmem:[%s3 + $0x2d8] sm:$0xf]
        %v939 = vld [vmem:[%s3 + $0x2dc] sm:$0xff]
        %v940 = vld [vmem:[%s3 + $0x2e4] sm:$0xf]
        %v941 = vld [vmem:[%s3 + $0x2e8] sm:$0xff]
        %v942 = vld [vmem:[%s3 + $0x2f0] sm:$0xf]
        %v943 = vld [vmem:[%s3 + $0x2f4] sm:$0xff]
        %v944 = vld [vmem:[%s3 + $0x2fc] sm:$0xf]
        %v945 = vld [vmem:[%s4] sm:$0x7]
        %v947 = vlaneseq
        %v948 = vshrl.u32 %v947, 7
        %v949 = vsub.s32 0, %v948
        %v950 = vrot.slane %v945, %v949
        %v951 = vlaneseq
        %v952 = vshrl.u32 %v951, 7
        %v953 = vsub.s32 1, %v952
        %v954 = vrot.slane %v945, %v953
        %v955 = vlaneseq
        %v956 = vshrl.u32 %v955, 7
        %v957 = vsub.s32 2, %v956
        %v958 = vrot.slane %v945, %v957
        %v1090 = vunpack.c.l.b16 %v817
        %v1091 = vunpack.c.h.b16 %v817
        %v1092 = vunpack.c.l.b16 %v818
        %v1093 = vunpack.c.l.b16 %v819
        %v1094 = vunpack.c.h.b16 %v819
        %v1095 = vunpack.c.l.b16 %v820
        %v1096 = vunpack.c.l.b16 %v821
        %v1097 = vunpack.c.h.b16 %v821
        %v1098 = vunpack.c.l.b16 %v822
        %v1099 = vunpack.c.l.b16 %v823
        %v1100 = vunpack.c.h.b16 %v823
        %v1101 = vunpack.c.l.b16 %v824
        %v1102 = vunpack.c.l.b16 %v825
        %v1103 = vunpack.c.h.b16 %v825
        %v1104 = vunpack.c.l.b16 %v826
        %v1105 = vunpack.c.l.b16 %v827
        %v1106 = vunpack.c.h.b16 %v827
        %v1107 = vunpack.c.l.b16 %v828
        %v1108 = vunpack.c.l.b16 %v829
        %v1109 = vunpack.c.h.b16 %v829
        %v1110 = vunpack.c.l.b16 %v830
        %v1111 = vunpack.c.l.b16 %v831
        %v1112 = vunpack.c.h.b16 %v831
        %v1113 = vunpack.c.l.b16 %v832
        %v1114 = vunpack.c.l.b16 %v833
        %v1115 = vunpack.c.h.b16 %v833
        %v1116 = vunpack.c.l.b16 %v834
        %v1117 = vunpack.c.l.b16 %v835
        %v1118 = vunpack.c.h.b16 %v835
        %v1119 = vunpack.c.l.b16 %v836
        %v1120 = vunpack.c.l.b16 %v837
        %v1121 = vunpack.c.h.b16 %v837
        %v1122 = vunpack.c.l.b16 %v838
        %v1123 = vunpack.c.l.b16 %v839
        %v1124 = vunpack.c.h.b16 %v839
        %v1125 = vunpack.c.l.b16 %v840
        %v1126 = vunpack.c.l.b16 %v841
        %v1127 = vunpack.c.h.b16 %v841
        %v1128 = vunpack.c.l.b16 %v842
        %v1129 = vunpack.c.l.b16 %v843
        %v1130 = vunpack.c.h.b16 %v843
        %v1131 = vunpack.c.l.b16 %v844
        %v1132 = vunpack.c.l.b16 %v845
        %v1133 = vunpack.c.h.b16 %v845
        %v1134 = vunpack.c.l.b16 %v846
        %v1135 = vunpack.c.l.b16 %v847
        %v1136 = vunpack.c.h.b16 %v847
        %v1137 = vunpack.c.l.b16 %v848
        %v1138 = vunpack.c.l.b16 %v849
        %v1139 = vunpack.c.h.b16 %v849
        %v1140 = vunpack.c.l.b16 %v850
        %v1141 = vunpack.c.l.b16 %v851
        %v1142 = vunpack.c.h.b16 %v851
        %v1143 = vunpack.c.l.b16 %v852
        %v1144 = vunpack.c.l.b16 %v853
        %v1145 = vunpack.c.h.b16 %v853
        %v1146 = vunpack.c.l.b16 %v854
        %v1147 = vunpack.c.l.b16 %v855
        %v1148 = vunpack.c.h.b16 %v855
        %v1149 = vunpack.c.l.b16 %v856
        %v1150 = vunpack.c.l.b16 %v857
        %v1151 = vunpack.c.h.b16 %v857
        %v1152 = vunpack.c.l.b16 %v858
        %v1153 = vunpack.c.l.b16 %v859
        %v1154 = vunpack.c.h.b16 %v859
        %v1155 = vunpack.c.l.b16 %v860
        %v1156 = vunpack.c.l.b16 %v861
        %v1157 = vunpack.c.h.b16 %v861
        %v1158 = vunpack.c.l.b16 %v862
        %v1159 = vunpack.c.l.b16 %v863
        %v1160 = vunpack.c.h.b16 %v863
        %v1161 = vunpack.c.l.b16 %v864
        %v1162 = vunpack.c.l.b16 %v865
        %v1163 = vunpack.c.h.b16 %v865
        %v1164 = vunpack.c.l.b16 %v866
        %v1165 = vunpack.c.l.b16 %v867
        %v1166 = vunpack.c.h.b16 %v867
        %v1167 = vunpack.c.l.b16 %v868
        %v1168 = vunpack.c.l.b16 %v869
        %v1169 = vunpack.c.h.b16 %v869
        %v1170 = vunpack.c.l.b16 %v870
        %v1171 = vunpack.c.l.b16 %v871
        %v1172 = vunpack.c.h.b16 %v871
        %v1173 = vunpack.c.l.b16 %v872
        %v1174 = vunpack.c.l.b16 %v873
        %v1175 = vunpack.c.h.b16 %v873
        %v1176 = vunpack.c.l.b16 %v874
        %v1177 = vunpack.c.l.b16 %v875
        %v1178 = vunpack.c.h.b16 %v875
        %v1179 = vunpack.c.l.b16 %v876
        %v1180 = vunpack.c.l.b16 %v877
        %v1181 = vunpack.c.h.b16 %v877
        %v1182 = vunpack.c.l.b16 %v878
        %v1183 = vunpack.c.l.b16 %v879
        %v1184 = vunpack.c.h.b16 %v879
        %v1185 = vunpack.c.l.b16 %v880
        %v1186 = vunpack.c.l.b16 %v881
        %v1187 = vunpack.c.h.b16 %v881
        %v1188 = vunpack.c.l.b16 %v882
        %v1189 = vunpack.c.l.b16 %v883
        %v1190 = vunpack.c.h.b16 %v883
        %v1191 = vunpack.c.l.b16 %v884
        %v1192 = vunpack.c.l.b16 %v885
        %v1193 = vunpack.c.h.b16 %v885
        %v1194 = vunpack.c.l.b16 %v886
        %v1195 = vunpack.c.l.b16 %v887
        %v1196 = vunpack.c.h.b16 %v887
        %v1197 = vunpack.c.l.b16 %v888
        %v1198 = vunpack.c.l.b16 %v889
        %v1199 = vunpack.c.h.b16 %v889
        %v1200 = vunpack.c.l.b16 %v890
        %v1201 = vunpack.c.l.b16 %v891
        %v1202 = vunpack.c.h.b16 %v891
        %v1203 = vunpack.c.l.b16 %v892
        %v1204 = vunpack.c.l.b16 %v893
        %v1205 = vunpack.c.h.b16 %v893
        %v1206 = vunpack.c.l.b16 %v894
        %v1207 = vunpack.c.l.b16 %v895
        %v1208 = vunpack.c.h.b16 %v895
        %v1209 = vunpack.c.l.b16 %v896
        %v1210 = vunpack.c.l.b16 %v897
        %v1211 = vunpack.c.h.b16 %v897
        %v1212 = vunpack.c.l.b16 %v898
        %v1213 = vunpack.c.l.b16 %v899
        %v1214 = vunpack.c.h.b16 %v899
        %v1215 = vunpack.c.l.b16 %v900
        %v1216 = vunpack.c.l.b16 %v901
        %v1217 = vunpack.c.h.b16 %v901
        %v1218 = vunpack.c.l.b16 %v902
        %v1219 = vunpack.c.l.b16 %v903
        %v1220 = vunpack.c.h.b16 %v903
        %v1221 = vunpack.c.l.b16 %v904
        %v1222 = vunpack.c.l.b16 %v905
        %v1223 = vunpack.c.h.b16 %v905
        %v1224 = vunpack.c.l.b16 %v906
        %v1225 = vunpack.c.l.b16 %v907
        %v1226 = vunpack.c.h.b16 %v907
        %v1227 = vunpack.c.l.b16 %v908
        %v1228 = vunpack.c.l.b16 %v909
        %v1229 = vunpack.c.h.b16 %v909
        %v1230 = vunpack.c.l.b16 %v910
        %v1231 = vunpack.c.l.b16 %v911
        %v1232 = vunpack.c.h.b16 %v911
        %v1233 = vunpack.c.l.b16 %v912
        %v1234 = vunpack.c.l.b16 %v913
        %v1235 = vunpack.c.h.b16 %v913
        %v1236 = vunpack.c.l.b16 %v914
        %v1237 = vunpack.c.l.b16 %v915
        %v1238 = vunpack.c.h.b16 %v915
        %v1239 = vunpack.c.l.b16 %v916
        %v1240 = vunpack.c.l.b16 %v917
        %v1241 = vunpack.c.h.b16 %v917
        %v1242 = vunpack.c.l.b16 %v918
        %v1243 = vunpack.c.l.b16 %v919
        %v1244 = vunpack.c.h.b16 %v919
        %v1245 = vunpack.c.l.b16 %v920
        %v1246 = vunpack.c.l.b16 %v921
        %v1247 = vunpack.c.h.b16 %v921
        %v1248 = vunpack.c.l.b16 %v922
        %v1249 = vunpack.c.l.b16 %v923
        %v1250 = vunpack.c.h.b16 %v923
        %v1251 = vunpack.c.l.b16 %v924
        %v1252 = vunpack.c.l.b16 %v925
        %v1253 = vunpack.c.h.b16 %v925
        %v1254 = vunpack.c.l.b16 %v926
        %v1255 = vunpack.c.l.b16 %v927
        %v1256 = vunpack.c.h.b16 %v927
        %v1257 = vunpack.c.l.b16 %v928
        %v1258 = vunpack.c.l.b16 %v929
        %v1259 = vunpack.c.h.b16 %v929
        %v1260 = vunpack.c.l.b16 %v930
        %v1261 = vunpack.c.l.b16 %v931
        %v1262 = vunpack.c.h.b16 %v931
        %v1263 = vunpack.c.l.b16 %v932
        %v1264 = vunpack.c.l.b16 %v933
        %v1265 = vunpack.c.h.b16 %v933
        %v1266 = vunpack.c.l.b16 %v934
        %v1267 = vunpack.c.l.b16 %v935
        %v1268 = vunpack.c.h.b16 %v935
        %v1269 = vunpack.c.l.b16 %v936
        %v1270 = vunpack.c.l.b16 %v937
        %v1271 = vunpack.c.h.b16 %v937
        %v1272 = vunpack.c.l.b16 %v938
        %v1273 = vunpack.c.l.b16 %v939
        %v1274 = vunpack.c.h.b16 %v939
        %v1275 = vunpack.c.l.b16 %v940
        %v1276 = vunpack.c.l.b16 %v941
        %v1277 = vunpack.c.h.b16 %v941
        %v1278 = vunpack.c.l.b16 %v942
        %v1279 = vunpack.c.l.b16 %v943
        %v1280 = vunpack.c.h.b16 %v943
        %v1281 = vunpack.c.l.b16 %v944
        %v1282 = vpack.c.b16 %v1093, %v1090
        %v1283 = vpack.c.b16 %v1094, %v1091
        %v1284 = vpack.c.b16 %v1095, %v1092
        %v1285 = vpack.c.b16 %v1099, %v1096
        %v1286 = vpack.c.b16 %v1100, %v1097
        %v1287 = vpack.c.b16 %v1101, %v1098
        %v1288 = vpack.c.b16 %v1105, %v1102
        %v1289 = vpack.c.b16 %v1106, %v1103
        %v1290 = vpack.c.b16 %v1107, %v1104
        %v1291 = vpack.c.b16 %v1111, %v1108
        %v1292 = vpack.c.b16 %v1112, %v1109
        %v1293 = vpack.c.b16 %v1113, %v1110
        %v1294 = vpack.c.b16 %v1117, %v1114
        %v1295 = vpack.c.b16 %v1118, %v1115
        %v1296 = vpack.c.b16 %v1119, %v1116
        %v1297 = vpack.c.b16 %v1123, %v1120
        %v1298 = vpack.c.b16 %v1124, %v1121
        %v1299 = vpack.c.b16 %v1125, %v1122
        %v1300 = vpack.c.b16 %v1129, %v1126
        %v1301 = vpack.c.b16 %v1130, %v1127
        %v1302 = vpack.c.b16 %v1131, %v1128
        %v1303 = vpack.c.b16 %v1135, %v1132
        %v1304 = vpack.c.b16 %v1136, %v1133
        %v1305 = vpack.c.b16 %v1137, %v1134
        %v1306 = vpack.c.b16 %v1141, %v1138
        %v1307 = vpack.c.b16 %v1142, %v1139
        %v1308 = vpack.c.b16 %v1143, %v1140
        %v1309 = vpack.c.b16 %v1147, %v1144
        %v1310 = vpack.c.b16 %v1148, %v1145
        %v1311 = vpack.c.b16 %v1149, %v1146
        %v1312 = vpack.c.b16 %v1153, %v1150
        %v1313 = vpack.c.b16 %v1154, %v1151
        %v1314 = vpack.c.b16 %v1155, %v1152
        %v1315 = vpack.c.b16 %v1159, %v1156
        %v1316 = vpack.c.b16 %v1160, %v1157
        %v1317 = vpack.c.b16 %v1161, %v1158
        %v1318 = vpack.c.b16 %v1165, %v1162
        %v1319 = vpack.c.b16 %v1166, %v1163
        %v1320 = vpack.c.b16 %v1167, %v1164
        %v1321 = vpack.c.b16 %v1171, %v1168
        %v1322 = vpack.c.b16 %v1172, %v1169
        %v1323 = vpack.c.b16 %v1173, %v1170
        %v1324 = vpack.c.b16 %v1177, %v1174
        %v1325 = vpack.c.b16 %v1178, %v1175
        %v1326 = vpack.c.b16 %v1179, %v1176
        %v1327 = vpack.c.b16 %v1183, %v1180
        %v1328 = vpack.c.b16 %v1184, %v1181
        %v1329 = vpack.c.b16 %v1185, %v1182
        %v1330 = vpack.c.b16 %v1189, %v1186
        %v1331 = vpack.c.b16 %v1190, %v1187
        %v1332 = vpack.c.b16 %v1191, %v1188
        %v1333 = vpack.c.b16 %v1195, %v1192
        %v1334 = vpack.c.b16 %v1196, %v1193
        %v1335 = vpack.c.b16 %v1197, %v1194
        %v1336 = vpack.c.b16 %v1201, %v1198
        %v1337 = vpack.c.b16 %v1202, %v1199
        %v1338 = vpack.c.b16 %v1203, %v1200
        %v1339 = vpack.c.b16 %v1207, %v1204
        %v1340 = vpack.c.b16 %v1208, %v1205
        %v1341 = vpack.c.b16 %v1209, %v1206
        %v1342 = vpack.c.b16 %v1213, %v1210
        %v1343 = vpack.c.b16 %v1214, %v1211
        %v1344 = vpack.c.b16 %v1215, %v1212
        %v1345 = vpack.c.b16 %v1219, %v1216
        %v1346 = vpack.c.b16 %v1220, %v1217
        %v1347 = vpack.c.b16 %v1221, %v1218
        %v1348 = vpack.c.b16 %v1225, %v1222
        %v1349 = vpack.c.b16 %v1226, %v1223
        %v1350 = vpack.c.b16 %v1227, %v1224
        %v1351 = vpack.c.b16 %v1231, %v1228
        %v1352 = vpack.c.b16 %v1232, %v1229
        %v1353 = vpack.c.b16 %v1233, %v1230
        %v1354 = vpack.c.b16 %v1237, %v1234
        %v1355 = vpack.c.b16 %v1238, %v1235
        %v1356 = vpack.c.b16 %v1239, %v1236
        %v1357 = vpack.c.b16 %v1243, %v1240
        %v1358 = vpack.c.b16 %v1244, %v1241
        %v1359 = vpack.c.b16 %v1245, %v1242
        %v1360 = vpack.c.b16 %v1249, %v1246
        %v1361 = vpack.c.b16 %v1250, %v1247
        %v1362 = vpack.c.b16 %v1251, %v1248
        %v1363 = vpack.c.b16 %v1255, %v1252
        %v1364 = vpack.c.b16 %v1256, %v1253
        %v1365 = vpack.c.b16 %v1257, %v1254
        %v1366 = vpack.c.b16 %v1261, %v1258
        %v1367 = vpack.c.b16 %v1262, %v1259
        %v1368 = vpack.c.b16 %v1263, %v1260
        %v1369 = vpack.c.b16 %v1267, %v1264
        %v1370 = vpack.c.b16 %v1268, %v1265
        %v1371 = vpack.c.b16 %v1269, %v1266
        %v1372 = vpack.c.b16 %v1273, %v1270
        %v1373 = vpack.c.b16 %v1274, %v1271
        %v1374 = vpack.c.b16 %v1275, %v1272
        %v1375 = vpack.c.b16 %v1279, %v1276
        %v1376 = vpack.c.b16 %v1280, %v1277
        %v1377 = vpack.c.b16 %v1281, %v1278
        %1474 = vmatprep.subr.bf16.mxu0 %v1283
        %1475 = vmatpush1.bf16.msra.mxu0 %v1282
        %1476 = vmatprep.subr.bf16.mxu0 %v1286
        %1477 = vmatpush1.bf16.msra.mxu0 %v1285
        %1478 = vmatprep.subr.bf16.mxu0 %v1289
        %1479 = vmatpush1.bf16.msra.mxu0 %v1288
        %1480 = vmatprep.subr.bf16.mxu0 %v1292
        %1481 = vmatpush1.bf16.msra.mxu0 %v1291
        %1482 = vmatprep.subr.bf16.mxu0 %v1295
        %1483 = vmatpush1.bf16.msra.mxu0 %v1294
        %1484 = vmatprep.subr.bf16.mxu0 %v1298
        %1485 = vmatpush1.bf16.msra.mxu0 %v1297
        %1486 = vmatprep.subr.bf16.mxu0 %v1301
        %1487 = vmatpush1.bf16.msra.mxu0 %v1300
        %1488 = vmatprep.subr.bf16.mxu0 %v1304
        %1489 = vmatpush1.bf16.msra.mxu0 %v1303
        %1490 = vmatprep.subr.bf16.mxu0 %v1307
        %1491 = vmatpush1.bf16.msra.mxu0 %v1306
        %1492 = vmatprep.subr.bf16.mxu0 %v1310
        %1493 = vmatpush1.bf16.msra.mxu0 %v1309
        %1494 = vmatprep.subr.bf16.mxu0 %v1313
        %1495 = vmatpush1.bf16.msra.mxu0 %v1312
        %1496 = vmatprep.subr.bf16.mxu0 %v1316
        %1497 = vmatpush1.bf16.msra.mxu0 %v1315
        %1498 = vmatprep.subr.bf16.mxu0 %v1319
        %1499 = vmatpush1.bf16.msra.mxu0 %v1318
        %1500 = vmatprep.subr.bf16.mxu0 %v1322
        %1501 = vmatpush1.bf16.msra.mxu0 %v1321
        %1502 = vmatprep.subr.bf16.mxu0 %v1325
        %1503 = vmatpush1.bf16.msra.mxu0 %v1324
        %1504 = vmatprep.subr.bf16.mxu0 %v1328
        %1505 = vmatpush1.bf16.msra.mxu0 %v1327
        %1506 = vmatprep.mubr.bf16.mxu0 %v790
        %1507 = vmatmul.mubr.bf16.gmra.mrb[0].mxu0 %v789
        %v1508 = vpop.f32.mrb[0].mxu0
        %v1509 = vadd.f32 %v950, %v1508
        %v1510 = vpop.f32.mrb[0].mxu0
        %v1511 = vadd.f32 %v954, %v1510
        %v1512 = vpop.f32.mrb[0].mxu0
        %v1513 = vadd.f32 %v950, %v1512
        %v1514 = vpop.f32.mrb[0].mxu0
        %v1515 = vadd.f32 %v954, %v1514
        %1516 = vmatprep.mubr.bf16.mxu0 %v794
        %1517 = vmatmul.mubr.bf16.gmra.mrb[0].mxu0 %v793
        %v1518 = vpop.f32.mrb[0].mxu0
        %v1519 = vadd.f32 %v950, %v1518
        %v1520 = vpop.f32.mrb[0].mxu0
        %v1521 = vadd.f32 %v954, %v1520
        %v1522 = vpop.f32.mrb[0].mxu0
        %v1523 = vadd.f32 %v950, %v1522
        %v1524 = vpop.f32.mrb[0].mxu0
        %v1525 = vadd.f32 %v954, %v1524
        %1526 = vmatprep.mubr.bf16.mxu0 %v798
        %1527 = vmatmul.mubr.bf16.gmra.mrb[0].mxu0 %v797
        %v1528 = vpop.f32.mrb[0].mxu0
        %v1529 = vadd.f32 %v950, %v1528
        %v1530 = vpop.f32.mrb[0].mxu0
        %v1531 = vadd.f32 %v954, %v1530
        %v1532 = vpop.f32.mrb[0].mxu0
        %v1533 = vadd.f32 %v950, %v1532
        %v1534 = vpop.f32.mrb[0].mxu0
        %v1535 = vadd.f32 %v954, %v1534
        %1536 = vmatprep.mubr.bf16.mxu0 %v802
        %1537 = vmatmul.mubr.bf16.gmra.mrb[0].mxu0 %v801
        %v1538 = vpop.f32.mrb[0].mxu0
        %v1539 = vadd.f32 %v950, %v1538
        %v1540 = vpop.f32.mrb[0].mxu0
        %v1541 = vadd.f32 %v954, %v1540
        %v1542 = vpop.f32.mrb[0].mxu0
        %v1543 = vadd.f32 %v950, %v1542
        %v1544 = vpop.f32.mrb[0].mxu0
        %v1545 = vadd.f32 %v954, %v1544
        %1546 = vmatprep.mubr.bf16.mxu0 %v806
        %1547 = vmatmul.mubr.bf16.gmra.mrb[0].mxu0 %v805
        %v1548 = vpop.f32.mrb[0].mxu0
        %v1549 = vadd.f32 %v950, %v1548
        %v1550 = vpop.f32.mrb[0].mxu0
        %v1551 = vadd.f32 %v954, %v1550
        %v1552 = vpop.f32.mrb[0].mxu0
        %v1553 = vadd.f32 %v950, %v1552
        %v1554 = vpop.f32.mrb[0].mxu0
        %v1555 = vadd.f32 %v954, %v1554
        %1556 = vmatprep.mubr.bf16.mxu0 %v810
        %1557 = vmatmul.mubr.bf16.gmra.mrb[0].mxu0 %v809
        %v1558 = vpop.f32.mrb[0].mxu0
        %v1559 = vadd.f32 %v950, %v1558
        %v1560 = vpop.f32.mrb[0].mxu0
        %v1561 = vadd.f32 %v954, %v1560
        %v1562 = vpop.f32.mrb[0].mxu0
        %v1563 = vadd.f32 %v950, %v1562
        %v1564 = vpop.f32.mrb[0].mxu0
        %v1565 = vadd.f32 %v954, %v1564
        %1566 = vmatprep.mubr.bf16.mxu0 %v814
        %1567 = vmatmul.mubr.bf16.gmra.mrb[0].mxu0 %v813
        %v1568 = vpop.f32.mrb[0].mxu0
        %v1569 = vadd.f32 %v950, %v1568
        %v1570 = vpop.f32.mrb[0].mxu0
        %v1571 = vadd.f32 %v954, %v1570
        %v1572 = vpop.f32.mrb[0].mxu0
        %v1573 = vpop.f32.mrb[0].mxu0
        %1574 = vdwg.mxu0
        %1575 = vmatprep.subr.bf16.mxu0 %v1331
        %1576 = vmatpush1.bf16.msra.mxu0 %v1330
        %1577 = vmatprep.subr.bf16.mxu0 %v1334
        %1578 = vmatpush1.bf16.msra.mxu0 %v1333
        %1579 = vmatprep.subr.bf16.mxu0 %v1337
        %1580 = vmatpush1.bf16.msra.mxu0 %v1336
        %1581 = vmatprep.subr.bf16.mxu0 %v1340
        %1582 = vmatpush1.bf16.msra.mxu0 %v1339
        %1583 = vmatprep.subr.bf16.mxu0 %v1343
        %1584 = vmatpush1.bf16.msra.mxu0 %v1342
        %1585 = vmatprep.subr.bf16.mxu0 %v1346
        %1586 = vmatpush1.bf16.msra.mxu0 %v1345
        %1587 = vmatprep.subr.bf16.mxu0 %v1349
        %1588 = vmatpush1.bf16.msra.mxu0 %v1348
        %1589 = vmatprep.subr.bf16.mxu0 %v1352
        %1590 = vmatpush1.bf16.msra.mxu0 %v1351
        %1591 = vmatprep.subr.bf16.mxu0 %v1355
        %1592 = vmatpush1.bf16.msra.mxu0 %v1354
        %1593 = vmatprep.subr.bf16.mxu0 %v1358
        %1594 = vmatpush1.bf16.msra.mxu0 %v1357
        %1595 = vmatprep.subr.bf16.mxu0 %v1361
        %1596 = vmatpush1.bf16.msra.mxu0 %v1360
        %1597 = vmatprep.subr.bf16.mxu0 %v1364
        %1598 = vmatpush1.bf16.msra.mxu0 %v1363
        %1599 = vmatprep.subr.bf16.mxu0 %v1367
        %1600 = vmatpush1.bf16.msra.mxu0 %v1366
        %1601 = vmatprep.subr.bf16.mxu0 %v1370
        %1602 = vmatpush1.bf16.msra.mxu0 %v1369
        %1603 = vmatprep.subr.bf16.mxu0 %v1373
        %1604 = vmatpush1.bf16.msra.mxu0 %v1372
        %1605 = vmatprep.subr.bf16.mxu0 %v1376
        %1606 = vmatpush1.bf16.msra.mxu0 %v1375
        %1607 = vmatprep.mubr.bf16.mxu0 %v792
        %1608 = vmatmul.mubr.bf16.gmra.mrb[0].mxu0 %v791
        %v1609 = vpop.f32.mrb[0].mxu0
        %v1610 = vadd.f32 %v1509, %v1609
        %v1611 = vpop.f32.mrb[0].mxu0
        %v1612 = vadd.f32 %v1511, %v1611
        %v1613 = vpop.f32.mrb[0].mxu0
        %v1614 = vadd.f32 %v1513, %v1613
        %v1615 = vpop.f32.mrb[0].mxu0
        %v1616 = vadd.f32 %v1515, %v1615
        %1617 = vmatprep.mubr.bf16.mxu0 %v796
        %1618 = vmatmul.mubr.bf16.gmra.mrb[0].mxu0 %v795
        %v1619 = vpop.f32.mrb[0].mxu0
        %v1620 = vadd.f32 %v1519, %v1619
        %v1621 = vpop.f32.mrb[0].mxu0
        %v1622 = vadd.f32 %v1521, %v1621
        %v1623 = vpop.f32.mrb[0].mxu0
        %v1624 = vadd.f32 %v1523, %v1623
        %v1625 = vpop.f32.mrb[0].mxu0
        %v1626 = vadd.f32 %v1525, %v1625
        %1627 = vmatprep.mubr.bf16.mxu0 %v800
        %1628 = vmatmul.mubr.bf16.gmra.mrb[0].mxu0 %v799
        %v1629 = vpop.f32.mrb[0].mxu0
        %v1630 = vadd.f32 %v1529, %v1629
        %v1631 = vpop.f32.mrb[0].mxu0
        %v1632 = vadd.f32 %v1531, %v1631
        %v1633 = vpop.f32.mrb[0].mxu0
        %v1634 = vadd.f32 %v1533, %v1633
        %v1635 = vpop.f32.mrb[0].mxu0
        %v1636 = vadd.f32 %v1535, %v1635
        %1637 = vmatprep.mubr.bf16.mxu0 %v804
        %1638 = vmatmul.mubr.bf16.gmra.mrb[0].mxu0 %v803
        %v1639 = vpop.f32.mrb[0].mxu0
        %v1640 = vadd.f32 %v1539, %v1639
        %v1641 = vpop.f32.mrb[0].mxu0
        %v1642 = vadd.f32 %v1541, %v1641
        %v1643 = vpop.f32.mrb[0].mxu0
        %v1644 = vadd.f32 %v1543, %v1643
        %v1645 = vpop.f32.mrb[0].mxu0
        %v1646 = vadd.f32 %v1545, %v1645
        %1647 = vmatprep.mubr.bf16.mxu0 %v808
        %1648 = vmatmul.mubr.bf16.gmra.mrb[0].mxu0 %v807
        %v1649 = vpop.f32.mrb[0].mxu0
        %v1650 = vadd.f32 %v1549, %v1649
        %v1651 = vpop.f32.mrb[0].mxu0
        %v1652 = vadd.f32 %v1551, %v1651
        %v1653 = vpop.f32.mrb[0].mxu0
        %v1654 = vadd.f32 %v1553, %v1653
        %v1655 = vpop.f32.mrb[0].mxu0
        %v1656 = vadd.f32 %v1555, %v1655
        %1657 = vmatprep.mubr.bf16.mxu0 %v812
        %1658 = vmatmul.mubr.bf16.gmra.mrb[0].mxu0 %v811
        %v1659 = vpop.f32.mrb[0].mxu0
        %v1660 = vadd.f32 %v1559, %v1659
        %v1661 = vpop.f32.mrb[0].mxu0
        %v1662 = vadd.f32 %v1561, %v1661
        %v1663 = vpop.f32.mrb[0].mxu0
        %v1664 = vadd.f32 %v1563, %v1663
        %v1665 = vpop.f32.mrb[0].mxu0
        %v1666 = vadd.f32 %v1565, %v1665
        %1667 = vmatprep.mubr.bf16.mxu0 %v816
        %1668 = vmatmul.mubr.bf16.gmra.mrb[0].mxu0 %v815
        %v1669 = vpop.f32.mrb[0].mxu0
        %v1670 = vadd.f32 %v1569, %v1669
        %v1671 = vpop.f32.mrb[0].mxu0
        %v1672 = vadd.f32 %v1571, %v1671
        %v1673 = vpop.f32.mrb[0].mxu0
        %v1674 = vpop.f32.mrb[0].mxu0
        %1675 = vdwg.mxu0
        %1676 = vmatprep.subr.bf16.mxu0 0
        %1677 = vmatpush1.bf16.msra.mxu0 %v1284
        %1678 = vmatprep.subr.bf16.mxu0 0
        %1679 = vmatpush1.bf16.msra.mxu0 %v1287
        %1680 = vmatprep.subr.bf16.mxu0 0
        %1681 = vmatpush1.bf16.msra.mxu0 %v1290
        %1682 = vmatprep.subr.bf16.mxu0 0
        %1683 = vmatpush1.bf16.msra.mxu0 %v1293
        %1684 = vmatprep.subr.bf16.mxu0 0
        %1685 = vmatpush1.bf16.msra.mxu0 %v1296
        %1686 = vmatprep.subr.bf16.mxu0 0
        %1687 = vmatpush1.bf16.msra.mxu0 %v1299
        %1688 = vmatprep.subr.bf16.mxu0 0
        %1689 = vmatpush1.bf16.msra.mxu0 %v1302
        %1690 = vmatprep.subr.bf16.mxu0 0
        %1691 = vmatpush1.bf16.msra.mxu0 %v1305
        %1692 = vmatprep.subr.bf16.mxu0 0
        %1693 = vmatpush1.bf16.msra.mxu0 %v1308
        %1694 = vmatprep.subr.bf16.mxu0 0
        %1695 = vmatpush1.bf16.msra.mxu0 %v1311
        %1696 = vmatprep.subr.bf16.mxu0 0
        %1697 = vmatpush1.bf16.msra.mxu0 %v1314
        %1698 = vmatprep.subr.bf16.mxu0 0
        %1699 = vmatpush1.bf16.msra.mxu0 %v1317
        %1700 = vmatprep.subr.bf16.mxu0 0
        %1701 = vmatpush1.bf16.msra.mxu0 %v1320
        %1702 = vmatprep.subr.bf16.mxu0 0
        %1703 = vmatpush1.bf16.msra.mxu0 %v1323
        %1704 = vmatprep.subr.bf16.mxu0 0
        %1705 = vmatpush1.bf16.msra.mxu0 %v1326
        %1706 = vmatprep.subr.bf16.mxu0 0
        %1707 = vmatpush1.bf16.msra.mxu0 %v1329
        %1708 = vmatprep.mubr.bf16.mxu0 %v790
        %1709 = vmatmul.mubr.bf16.gmra.mrb[0].mxu0 %v789
        %v1710 = vpop.f32.mrb[0].mxu0
        %v1711 = vadd.f32 %v958, %v1710
        %v1712 = vpop.f32.mrb[0].mxu0
        %v1713 = vpop.f32.mrb[0].mxu0
        %v1714 = vadd.f32 %v958, %v1713
        %v1715 = vpop.f32.mrb[0].mxu0
        %1716 = vmatprep.mubr.bf16.mxu0 %v794
        %1717 = vmatmul.mubr.bf16.gmra.mrb[0].mxu0 %v793
        %v1718 = vpop.f32.mrb[0].mxu0
        %v1719 = vadd.f32 %v958, %v1718
        %v1720 = vpop.f32.mrb[0].mxu0
        %v1721 = vpop.f32.mrb[0].mxu0
        %v1722 = vadd.f32 %v958, %v1721
        %v1723 = vpop.f32.mrb[0].mxu0
        %1724 = vmatprep.mubr.bf16.mxu0 %v798
        %1725 = vmatmul.mubr.bf16.gmra.mrb[0].mxu0 %v797
        %v1726 = vpop.f32.mrb[0].mxu0
        %v1727 = vadd.f32 %v958, %v1726
        %v1728 = vpop.f32.mrb[0].mxu0
        %v1729 = vpop.f32.mrb[0].mxu0
        %v1730 = vadd.f32 %v958, %v1729
        %v1731 = vpop.f32.mrb[0].mxu0
        %1732 = vmatprep.mubr.bf16.mxu0 %v802
        %1733 = vmatmul.mubr.bf16.gmra.mrb[0].mxu0 %v801
        %v1734 = vpop.f32.mrb[0].mxu0
        %v1735 = vadd.f32 %v958, %v1734
        %v1736 = vpop.f32.mrb[0].mxu0
        %v1737 = vpop.f32.mrb[0].mxu0
        %v1738 = vadd.f32 %v958, %v1737
        %v1739 = vpop.f32.mrb[0].mxu0
        %1740 = vmatprep.mubr.bf16.mxu0 %v806
        %1741 = vmatmul.mubr.bf16.gmra.mrb[0].mxu0 %v805
        %v1742 = vpop.f32.mrb[0].mxu0
        %v1743 = vadd.f32 %v958, %v1742
        %v1744 = vpop.f32.mrb[0].mxu0
        %v1745 = vpop.f32.mrb[0].mxu0
        %v1746 = vadd.f32 %v958, %v1745
        %v1747 = vpop.f32.mrb[0].mxu0
        %1748 = vmatprep.mubr.bf16.mxu0 %v810
        %1749 = vmatmul.mubr.bf16.gmra.mrb[0].mxu0 %v809
        %v1750 = vpop.f32.mrb[0].mxu0
        %v1751 = vadd.f32 %v958, %v1750
        %v1752 = vpop.f32.mrb[0].mxu0
        %v1753 = vpop.f32.mrb[0].mxu0
        %v1754 = vadd.f32 %v958, %v1753
        %v1755 = vpop.f32.mrb[0].mxu0
        %1756 = vmatprep.mubr.bf16.mxu0 %v814
        %1757 = vmatmul.mubr.bf16.gmra.mrb[0].mxu0 %v813
        %v1758 = vpop.f32.mrb[0].mxu0
        %v1759 = vadd.f32 %v958, %v1758
        %v1760 = vpop.f32.mrb[0].mxu0
        %v1761 = vpop.f32.mrb[0].mxu0
        %v1762 = vpop.f32.mrb[0].mxu0
        %1763 = vdwg.mxu0
        %1764 = vmatprep.subr.bf16.mxu0 0
        %1765 = vmatpush1.bf16.msra.mxu0 %v1332
        %1766 = vmatprep.subr.bf16.mxu0 0
        %1767 = vmatpush1.bf16.msra.mxu0 %v1335
        %1768 = vmatprep.subr.bf16.mxu0 0
        %1769 = vmatpush1.bf16.msra.mxu0 %v1338
        %1770 = vmatprep.subr.bf16.mxu0 0
        %1771 = vmatpush1.bf16.msra.mxu0 %v1341
        %1772 = vmatprep.subr.bf16.mxu0 0
        %1773 = vmatpush1.bf16.msra.mxu0 %v1344
        %1774 = vmatprep.subr.bf16.mxu0 0
        %1775 = vmatpush1.bf16.msra.mxu0 %v1347
        %1776 = vmatprep.subr.bf16.mxu0 0
        %1777 = vmatpush1.bf16.msra.mxu0 %v1350
        %1778 = vmatprep.subr.bf16.mxu0 0
        %1779 = vmatpush1.bf16.msra.mxu0 %v1353
        %1780 = vmatprep.subr.bf16.mxu0 0
        %1781 = vmatpush1.bf16.msra.mxu0 %v1356
        %1782 = vmatprep.subr.bf16.mxu0 0
        %1783 = vmatpush1.bf16.msra.mxu0 %v1359
        %1784 = vmatprep.subr.bf16.mxu0 0
        %1785 = vmatpush1.bf16.msra.mxu0 %v1362
        %1786 = vmatprep.subr.bf16.mxu0 0
        %1787 = vmatpush1.bf16.msra.mxu0 %v1365
        %1788 = vmatprep.subr.bf16.mxu0 0
        %1789 = vmatpush1.bf16.msra.mxu0 %v1368
        %1790 = vmatprep.subr.bf16.mxu0 0
        %1791 = vmatpush1.bf16.msra.mxu0 %v1371
        %1792 = vmatprep.subr.bf16.mxu0 0
        %1793 = vmatpush1.bf16.msra.mxu0 %v1374
        %1794 = vmatprep.subr.bf16.mxu0 0
        %1795 = vmatpush1.bf16.msra.mxu0 %v1377
        %1796 = vmatprep.mubr.bf16.mxu0 %v792
        %1797 = vmatmul.mubr.bf16.gmra.mrb[0].mxu0 %v791
        %v1798 = vpop.f32.mrb[0].mxu0
        %v1799 = vadd.f32 %v1711, %v1798
        %v1800 = vpop.f32.mrb[0].mxu0
        %v1801 = vpop.f32.mrb[0].mxu0
        %v1802 = vadd.f32 %v1714, %v1801
        %v1803 = vpop.f32.mrb[0].mxu0
        %1804 = vmatprep.mubr.bf16.mxu0 %v796
        %1805 = vmatmul.mubr.bf16.gmra.mrb[0].mxu0 %v795
        %v1806 = vpop.f32.mrb[0].mxu0
        %v1807 = vadd.f32 %v1719, %v1806
        %v1808 = vpop.f32.mrb[0].mxu0
        %v1809 = vpop.f32.mrb[0].mxu0
        %v1810 = vadd.f32 %v1722, %v1809
        %v1811 = vpop.f32.mrb[0].mxu0
        %1812 = vmatprep.mubr.bf16.mxu0 %v800
        %1813 = vmatmul.mubr.bf16.gmra.mrb[0].mxu0 %v799
        %v1814 = vpop.f32.mrb[0].mxu0
        %v1815 = vadd.f32 %v1727, %v1814
        %v1816 = vpop.f32.mrb[0].mxu0
        %v1817 = vpop.f32.mrb[0].mxu0
        %v1818 = vadd.f32 %v1730, %v1817
        %v1819 = vpop.f32.mrb[0].mxu0
        %1820 = vmatprep.mubr.bf16.mxu0 %v804
        %1821 = vmatmul.mubr.bf16.gmra.mrb[0].mxu0 %v803
        %v1822 = vpop.f32.mrb[0].mxu0
        %v1823 = vadd.f32 %v1735, %v1822
        %v1824 = vpop.f32.mrb[0].mxu0
        %v1825 = vpop.f32.mrb[0].mxu0
        %v1826 = vadd.f32 %v1738, %v1825
        %v1827 = vpop.f32.mrb[0].mxu0
        %1828 = vmatprep.mubr.bf16.mxu0 %v808
        %1829 = vmatmul.mubr.bf16.gmra.mrb[0].mxu0 %v807
        %v1830 = vpop.f32.mrb[0].mxu0
        %v1831 = vadd.f32 %v1743, %v1830
        %v1832 = vpop.f32.mrb[0].mxu0
        %v1833 = vpop.f32.mrb[0].mxu0
        %v1834 = vadd.f32 %v1746, %v1833
        %v1835 = vpop.f32.mrb[0].mxu0
        %1836 = vmatprep.mubr.bf16.mxu0 %v812
        %1837 = vmatmul.mubr.bf16.gmra.mrb[0].mxu0 %v811
        %v1838 = vpop.f32.mrb[0].mxu0
        %v1839 = vadd.f32 %v1751, %v1838
        %v1840 = vpop.f32.mrb[0].mxu0
        %v1841 = vpop.f32.mrb[0].mxu0
        %v1842 = vadd.f32 %v1754, %v1841
        %v1843 = vpop.f32.mrb[0].mxu0
        %1844 = vmatprep.mubr.bf16.mxu0 %v816
        %1845 = vmatmul.mubr.bf16.gmra.mrb[0].mxu0 %v815
        %v1846 = vpop.f32.mrb[0].mxu0
        %v1847 = vadd.f32 %v1759, %v1846
        %v1848 = vpop.f32.mrb[0].mxu0
        %v1849 = vpop.f32.mrb[0].mxu0
        %v1850 = vpop.f32.mrb[0].mxu0
        %1851 = vdwg.mxu0
        %v1852 = vmax.f32 %v1610, 0.0
        %v1853 = vmax.f32 %v1612, 0.0
        %v1854 = vmax.f32 %v1799, 0.0
        %v1855 = vmax.f32 %v1614, 0.0
        %v1856 = vmax.f32 %v1616, 0.0
        %v1857 = vmax.f32 %v1802, 0.0
        %v1858 = vmax.f32 %v1620, 0.0
        %v1859 = vmax.f32 %v1622, 0.0
        %v1860 = vmax.f32 %v1807, 0.0
        %v1861 = vmax.f32 %v1624, 0.0
        %v1862 = vmax.f32 %v1626, 0.0
        %v1863 = vmax.f32 %v1810, 0.0
        %v1864 = vmax.f32 %v1630, 0.0
        %v1865 = vmax.f32 %v1632, 0.0
        %v1866 = vmax.f32 %v1815, 0.0
        %v1867 = vmax.f32 %v1634, 0.0
        %v1868 = vmax.f32 %v1636, 0.0
        %v1869 = vmax.f32 %v1818, 0.0
        %v1870 = vmax.f32 %v1640, 0.0
        %v1871 = vmax.f32 %v1642, 0.0
        %v1872 = vmax.f32 %v1823, 0.0
        %v1873 = vmax.f32 %v1644, 0.0
        %v1874 = vmax.f32 %v1646, 0.0
        %v1875 = vmax.f32 %v1826, 0.0
        %v1876 = vmax.f32 %v1650, 0.0
        %v1877 = vmax.f32 %v1652, 0.0
        %v1878 = vmax.f32 %v1831, 0.0
        %v1879 = vmax.f32 %v1654, 0.0
        %v1880 = vmax.f32 %v1656, 0.0
        %v1881 = vmax.f32 %v1834, 0.0
        %v1882 = vmax.f32 %v1660, 0.0
        %v1883 = vmax.f32 %v1662, 0.0
        %v1884 = vmax.f32 %v1839, 0.0
        %v1885 = vmax.f32 %v1664, 0.0
        %v1886 = vmax.f32 %v1666, 0.0
        %v1887 = vmax.f32 %v1842, 0.0
        %v1888 = vmax.f32 %v1670, 0.0
        %v1889 = vmax.f32 %v1672, 0.0
        %v1890 = vmax.f32 %v1847, 0.0
        %v1891 = vpack.c.bf16 %v1855, %v1852
        %v1892 = vpack.c.bf16 %v1856, %v1853
        %v1893 = vpack.c.bf16 %v1857, %v1854
        %v1894 = vpack.c.bf16 %v1861, %v1858
        %v1895 = vpack.c.bf16 %v1862, %v1859
        %v1896 = vpack.c.bf16 %v1863, %v1860
        %v1897 = vpack.c.bf16 %v1867, %v1864
        %v1898 = vpack.c.bf16 %v1868, %v1865
        %v1899 = vpack.c.bf16 %v1869, %v1866
        %v1900 = vpack.c.bf16 %v1873, %v1870
        %v1901 = vpack.c.bf16 %v1874, %v1871
        %v1902 = vpack.c.bf16 %v1875, %v1872
        %v1903 = vpack.c.bf16 %v1879, %v1876
        %v1904 = vpack.c.bf16 %v1880, %v1877
        %v1905 = vpack.c.bf16 %v1881, %v1878
        %v1906 = vpack.c.bf16 %v1885, %v1882
        %v1907 = vpack.c.bf16 %v1886, %v1883
        %v1908 = vpack.c.bf16 %v1887, %v1884
        %v1909 = vpack.c.bf16 %v1888, %v1888
        %v1910 = vpack.c.bf16 %v1889, %v1889
        %v1911 = vpack.c.bf16 %v1890, %v1890
        %v1912 = vld [vmem:[%s5] sm:$0xf]
        %v1913 = vld [vmem:[%s5 + $0x4] sm:$0xf]
        %v1914 = vld [vmem:[%s5 + $0x8] sm:$0xf]
        %v1915 = vld [vmem:[%s5 + $0xc] sm:$0xf]
        %v1916 = vld [vmem:[%s5 + $0x10] sm:$0xf]
        %v1917 = vld [vmem:[%s5 + $0x14] sm:$0xf]
        %v1918 = vld [vmem:[%s5 + $0x18] sm:$0xf]
        %v1919 = vld [vmem:[%s5 + $0x1c] sm:$0xf]
        %v1920 = vld [vmem:[%s5 + $0x20] sm:$0xf]
        %v1921 = vld [vmem:[%s5 + $0x24] sm:$0xf]
        %v1922 = vld [vmem:[%s5 + $0x28] sm:$0xf]
        %v1923 = vld [vmem:[%s5 + $0x2c] sm:$0xf]
        %v1924 = vld [vmem:[%s5 + $0x30] sm:$0xf]
        %v1925 = vld [vmem:[%s5 + $0x34] sm:$0xf]
        %v1926 = vld [vmem:[%s5 + $0x38] sm:$0xf]
        %v1927 = vld [vmem:[%s5 + $0x3c] sm:$0xf]
        %v1928 = vld [vmem:[%s5 + $0x40] sm:$0xf]
        %v1929 = vld [vmem:[%s5 + $0x44] sm:$0xf]
        %v1930 = vld [vmem:[%s5 + $0x48] sm:$0xf]
        %v1931 = vld [vmem:[%s5 + $0x4c] sm:$0xf]
        %v1932 = vld [vmem:[%s5 + $0x50] sm:$0xf]
        %v1933 = vld [vmem:[%s5 + $0x54] sm:$0xf]
        %v1934 = vld [vmem:[%s5 + $0x58] sm:$0xf]
        %v1935 = vld [vmem:[%s5 + $0x5c] sm:$0xf]
        %v1936 = vld [vmem:[%s5 + $0x60] sm:$0xf]
        %v1937 = vld [vmem:[%s5 + $0x64] sm:$0xf]
        %v1938 = vld [vmem:[%s5 + $0x68] sm:$0xf]
        %v1939 = vld [vmem:[%s5 + $0x6c] sm:$0xf]
        %v1940 = vld [vmem:[%s5 + $0x70] sm:$0xf]
        %v1941 = vld [vmem:[%s5 + $0x74] sm:$0xf]
        %v1942 = vld [vmem:[%s5 + $0x78] sm:$0xf]
        %v1943 = vld [vmem:[%s5 + $0x7c] sm:$0xf]
        %v1944 = vld [vmem:[%s5 + $0x80] sm:$0xf]
        %v1945 = vld [vmem:[%s5 + $0x84] sm:$0xf]
        %v1946 = vld [vmem:[%s5 + $0x88] sm:$0xf]
        %v1947 = vld [vmem:[%s5 + $0x8c] sm:$0xf]
        %v1948 = vld [vmem:[%s5 + $0x90] sm:$0xf]
        %v1949 = vld [vmem:[%s5 + $0x94] sm:$0xf]
        %v1950 = vld [vmem:[%s5 + $0x98] sm:$0xf]
        %v1951 = vld [vmem:[%s5 + $0x9c] sm:$0xf]
        %v1952 = vld [vmem:[%s5 + $0xa0] sm:$0xf]
        %v1953 = vld [vmem:[%s5 + $0xa4] sm:$0xf]
        %v1954 = vld [vmem:[%s5 + $0xa8] sm:$0xf]
        %v1955 = vld [vmem:[%s5 + $0xac] sm:$0xf]
        %v1956 = vld [vmem:[%s5 + $0xb0] sm:$0xf]
        %v1957 = vld [vmem:[%s5 + $0xb4] sm:$0xf]
        %v1958 = vld [vmem:[%s5 + $0xb8] sm:$0xf]
        %v1959 = vld [vmem:[%s5 + $0xbc] sm:$0xf]
        %v1960 = vld [vmem:[%s6] sm:$0x1]
        %v1962 = vlaneseq
        %v1963 = vshrl.u32 %v1962, 7
        %v1964 = vsub.s32 0, %v1963
        %v1965 = vrot.slane %v1960, %v1964
        %v2015 = vunpack.c.l.b16 %v1912
        %v2016 = vunpack.c.l.b16 %v1913
        %v2017 = vunpack.c.l.b16 %v1914
        %v2018 = vunpack.c.l.b16 %v1915
        %v2019 = vunpack.c.l.b16 %v1916
        %v2020 = vunpack.c.l.b16 %v1917
        %v2021 = vunpack.c.l.b16 %v1918
        %v2022 = vunpack.c.l.b16 %v1919
        %v2023 = vunpack.c.l.b16 %v1920
        %v2024 = vunpack.c.l.b16 %v1921
        %v2025 = vunpack.c.l.b16 %v1922
        %v2026 = vunpack.c.l.b16 %v1923
        %v2027 = vunpack.c.l.b16 %v1924
        %v2028 = vunpack.c.l.b16 %v1925
        %v2029 = vunpack.c.l.b16 %v1926
        %v2030 = vunpack.c.l.b16 %v1927
        %v2031 = vunpack.c.l.b16 %v1928
        %v2032 = vunpack.c.l.b16 %v1929
        %v2033 = vunpack.c.l.b16 %v1930
        %v2034 = vunpack.c.l.b16 %v1931
        %v2035 = vunpack.c.l.b16 %v1932
        %v2036 = vunpack.c.l.b16 %v1933
        %v2037 = vunpack.c.l.b16 %v1934
        %v2038 = vunpack.c.l.b16 %v1935
        %v2039 = vunpack.c.l.b16 %v1936
        %v2040 = vunpack.c.l.b16 %v1937
        %v2041 = vunpack.c.l.b16 %v1938
        %v2042 = vunpack.c.l.b16 %v1939
        %v2043 = vunpack.c.l.b16 %v1940
        %v2044 = vunpack.c.l.b16 %v1941
        %v2045 = vunpack.c.l.b16 %v1942
        %v2046 = vunpack.c.l.b16 %v1943
        %v2047 = vunpack.c.l.b16 %v1944
        %v2048 = vunpack.c.l.b16 %v1945
        %v2049 = vunpack.c.l.b16 %v1946
        %v2050 = vunpack.c.l.b16 %v1947
        %v2051 = vunpack.c.l.b16 %v1948
        %v2052 = vunpack.c.l.b16 %v1949
        %v2053 = vunpack.c.l.b16 %v1950
        %v2054 = vunpack.c.l.b16 %v1951
        %v2055 = vunpack.c.l.b16 %v1952
        %v2056 = vunpack.c.l.b16 %v1953
        %v2057 = vunpack.c.l.b16 %v1954
        %v2058 = vunpack.c.l.b16 %v1955
        %v2059 = vunpack.c.l.b16 %v1956
        %v2060 = vunpack.c.l.b16 %v1957
        %v2061 = vunpack.c.l.b16 %v1958
        %v2062 = vunpack.c.l.b16 %v1959
        %v2063 = vpack.c.b16 %v2016, %v2015
        %v2064 = vpack.c.b16 %v2018, %v2017
        %v2065 = vpack.c.b16 %v2020, %v2019
        %v2066 = vpack.c.b16 %v2022, %v2021
        %v2067 = vpack.c.b16 %v2024, %v2023
        %v2068 = vpack.c.b16 %v2026, %v2025
        %v2069 = vpack.c.b16 %v2028, %v2027
        %v2070 = vpack.c.b16 %v2030, %v2029
        %v2071 = vpack.c.b16 %v2032, %v2031
        %v2072 = vpack.c.b16 %v2034, %v2033
        %v2073 = vpack.c.b16 %v2036, %v2035
        %v2074 = vpack.c.b16 %v2038, %v2037
        %v2075 = vpack.c.b16 %v2040, %v2039
        %v2076 = vpack.c.b16 %v2042, %v2041
        %v2077 = vpack.c.b16 %v2044, %v2043
        %v2078 = vpack.c.b16 %v2046, %v2045
        %v2079 = vpack.c.b16 %v2048, %v2047
        %v2080 = vpack.c.b16 %v2050, %v2049
        %v2081 = vpack.c.b16 %v2052, %v2051
        %v2082 = vpack.c.b16 %v2054, %v2053
        %v2083 = vpack.c.b16 %v2056, %v2055
        %v2084 = vpack.c.b16 %v2058, %v2057
        %v2085 = vpack.c.b16 %v2060, %v2059
        %v2086 = vpack.c.b16 %v2062, %v2061
        %2111 = vmatprep.subr.bf16.mxu0 0
        %2112 = vmatpush1.bf16.msra.mxu0 %v2063
        %2113 = vmatprep.subr.bf16.mxu0 0
        %2114 = vmatpush1.bf16.msra.mxu0 %v2064
        %2115 = vmatprep.subr.bf16.mxu0 0
        %2116 = vmatpush1.bf16.msra.mxu0 %v2065
        %2117 = vmatprep.subr.bf16.mxu0 0
        %2118 = vmatpush1.bf16.msra.mxu0 %v2066
        %2119 = vmatprep.subr.bf16.mxu0 0
        %2120 = vmatpush1.bf16.msra.mxu0 %v2067
        %2121 = vmatprep.subr.bf16.mxu0 0
        %2122 = vmatpush1.bf16.msra.mxu0 %v2068
        %2123 = vmatprep.subr.bf16.mxu0 0
        %2124 = vmatpush1.bf16.msra.mxu0 %v2069
        %2125 = vmatprep.subr.bf16.mxu0 0
        %2126 = vmatpush1.bf16.msra.mxu0 %v2070
        %2127 = vmatprep.subr.bf16.mxu0 0
        %2128 = vmatpush1.bf16.msra.mxu0 %v2071
        %2129 = vmatprep.subr.bf16.mxu0 0
        %2130 = vmatpush1.bf16.msra.mxu0 %v2072
        %2131 = vmatprep.subr.bf16.mxu0 0
        %2132 = vmatpush1.bf16.msra.mxu0 %v2073
        %2133 = vmatprep.subr.bf16.mxu0 0
        %2134 = vmatpush1.bf16.msra.mxu0 %v2074
        %2135 = vmatprep.subr.bf16.mxu0 0
        %2136 = vmatpush1.bf16.msra.mxu0 %v2075
        %2137 = vmatprep.subr.bf16.mxu0 0
        %2138 = vmatpush1.bf16.msra.mxu0 %v2076
        %2139 = vmatprep.subr.bf16.mxu0 0
        %2140 = vmatpush1.bf16.msra.mxu0 %v2077
        %2141 = vmatprep.subr.bf16.mxu0 0
        %2142 = vmatpush1.bf16.msra.mxu0 %v2078
        %2143 = vmatprep.mubr.bf16.mxu0 %v1892
        %2144 = vmatmul.mubr.bf16.gmra.mrb[0].mxu0 %v1891
        %v2145 = vpop.f32.mrb[0].mxu0
        %v2146 = vadd.f32 %v1965, %v2145
        %v2147 = vpop.f32.mrb[0].mxu0
        %v2148 = vpop.f32.mrb[0].mxu0
        %v2149 = vadd.f32 %v1965, %v2148
        %v2150 = vpop.f32.mrb[0].mxu0
        %2151 = vmatprep.mubr.bf16.mxu0 %v1895
        %2152 = vmatmul.mubr.bf16.gmra.mrb[0].mxu0 %v1894
        %v2153 = vpop.f32.mrb[0].mxu0
        %v2154 = vadd.f32 %v1965, %v2153
        %v2155 = vpop.f32.mrb[0].mxu0
        %v2156 = vpop.f32.mrb[0].mxu0
        %v2157 = vadd.f32 %v1965, %v2156
        %v2158 = vpop.f32.mrb[0].mxu0
        %2159 = vmatprep.mubr.bf16.mxu0 %v1898
        %2160 = vmatmul.mubr.bf16.gmra.mrb[0].mxu0 %v1897
        %v2161 = vpop.f32.mrb[0].mxu0
        %v2162 = vadd.f32 %v1965, %v2161
        %v2163 = vpop.f32.mrb[0].mxu0
        %v2164 = vpop.f32.mrb[0].mxu0
        %v2165 = vadd.f32 %v1965, %v2164
        %v2166 = vpop.f32.mrb[0].mxu0
        %2167 = vmatprep.mubr.bf16.mxu0 %v1901
        %2168 = vmatmul.mubr.bf16.gmra.mrb[0].mxu0 %v1900
        %v2169 = vpop.f32.mrb[0].mxu0
        %v2170 = vadd.f32 %v1965, %v2169
        %v2171 = vpop.f32.mrb[0].mxu0
        %v2172 = vpop.f32.mrb[0].mxu0
        %v2173 = vadd.f32 %v1965, %v2172
        %v2174 = vpop.f32.mrb[0].mxu0
        %2175 = vmatprep.mubr.bf16.mxu0 %v1904
        %2176 = vmatmul.mubr.bf16.gmra.mrb[0].mxu0 %v1903
        %v2177 = vpop.f32.mrb[0].mxu0
        %v2178 = vadd.f32 %v1965, %v2177
        %v2179 = vpop.f32.mrb[0].mxu0
        %v2180 = vpop.f32.mrb[0].mxu0
        %v2181 = vadd.f32 %v1965, %v2180
        %v2182 = vpop.f32.mrb[0].mxu0
        %2183 = vmatprep.mubr.bf16.mxu0 %v1907
        %2184 = vmatmul.mubr.bf16.gmra.mrb[0].mxu0 %v1906
        %v2185 = vpop.f32.mrb[0].mxu0
        %v2186 = vadd.f32 %v1965, %v2185
        %v2187 = vpop.f32.mrb[0].mxu0
        %v2188 = vpop.f32.mrb[0].mxu0
        %v2189 = vadd.f32 %v1965, %v2188
        %v2190 = vpop.f32.mrb[0].mxu0
        %2191 = vmatprep.mubr.bf16.mxu0 %v1910
        %2192 = vmatmul.mubr.bf16.gmra.mrb[0].mxu0 %v1909
        %v2193 = vpop.f32.mrb[0].mxu0
        %v2194 = vadd.f32 %v1965, %v2193
        %v2195 = vpop.f32.mrb[0].mxu0
        %v2196 = vpop.f32.mrb[0].mxu0
        %v2197 = vpop.f32.mrb[0].mxu0
        %2198 = vdwg.mxu0
        %2199 = vmatprep.subr.bf16.mxu0 0
        %2200 = vmatpush1.bf16.msra.mxu0 %v2079
        %2201 = vmatprep.subr.bf16.mxu0 0
        %2202 = vmatpush1.bf16.msra.mxu0 %v2080
        %2203 = vmatprep.subr.bf16.mxu0 0
        %2204 = vmatpush1.bf16.msra.mxu0 %v2081
        %2205 = vmatprep.subr.bf16.mxu0 0
        %2206 = vmatpush1.bf16.msra.mxu0 %v2082
        %2207 = vmatprep.subr.bf16.mxu0 0
        %2208 = vmatpush1.bf16.msra.mxu0 %v2083
        %2209 = vmatprep.subr.bf16.mxu0 0
        %2210 = vmatpush1.bf16.msra.mxu0 %v2084
        %2211 = vmatprep.subr.bf16.mxu0 0
        %2212 = vmatpush1.bf16.msra.mxu0 %v2085
        %2213 = vmatprep.subr.bf16.mxu0 0
        %2214 = vmatpush1.bf16.msra.mxu0 %v2086
        %2215 = vmatprep.subr.bf16.mxu0 0
        %2216 = vmatpush1.bf16.msra.mxu0 0
        %2217 = vmatprep.subr.bf16.mxu0 0
        %2218 = vmatpush1.bf16.msra.mxu0 0
        %2219 = vmatprep.subr.bf16.mxu0 0
        %2220 = vmatpush1.bf16.msra.mxu0 0
        %2221 = vmatprep.subr.bf16.mxu0 0
        %2222 = vmatpush1.bf16.msra.mxu0 0
        %2223 = vmatprep.subr.bf16.mxu0 0
        %2224 = vmatpush1.bf16.msra.mxu0 0
        %2225 = vmatprep.subr.bf16.mxu0 0
        %2226 = vmatpush1.bf16.msra.mxu0 0
        %2227 = vmatprep.subr.bf16.mxu0 0
        %2228 = vmatpush1.bf16.msra.mxu0 0
        %2229 = vmatprep.subr.bf16.mxu0 0
        %2230 = vmatpush1.bf16.msra.mxu0 0
        %2231 = vmatprep.mubr.bf16.mxu0 0
        %2232 = vmatmul.mubr.bf16.gmra.mrb[0].mxu0 %v1893
        %v2233 = vpop.f32.mrb[0].mxu0
        %v2234 = vadd.f32 %v2146, %v2233
        %v2235 = vpop.f32.mrb[0].mxu0
        %v2236 = vpop.f32.mrb[0].mxu0
        %v2237 = vadd.f32 %v2149, %v2236
        %v2238 = vpop.f32.mrb[0].mxu0
        %2239 = vmatprep.mubr.bf16.mxu0 0
        %2240 = vmatmul.mubr.bf16.gmra.mrb[0].mxu0 %v1896
        %v2241 = vpop.f32.mrb[0].mxu0
        %v2242 = vadd.f32 %v2154, %v2241
        %v2243 = vpop.f32.mrb[0].mxu0
        %v2244 = vpop.f32.mrb[0].mxu0
        %v2245 = vadd.f32 %v2157, %v2244
        %v2246 = vpop.f32.mrb[0].mxu0
        %2247 = vmatprep.mubr.bf16.mxu0 0
        %2248 = vmatmul.mubr.bf16.gmra.mrb[0].mxu0 %v1899
        %v2249 = vpop.f32.mrb[0].mxu0
        %v2250 = vadd.f32 %v2162, %v2249
        %v2251 = vpop.f32.mrb[0].mxu0
        %v2252 = vpop.f32.mrb[0].mxu0
        %v2253 = vadd.f32 %v2165, %v2252
        %v2254 = vpop.f32.mrb[0].mxu0
        %2255 = vmatprep.mubr.bf16.mxu0 0
        %2256 = vmatmul.mubr.bf16.gmra.mrb[0].mxu0 %v1902
        %v2257 = vpop.f32.mrb[0].mxu0
        %v2258 = vadd.f32 %v2170, %v2257
        %v2259 = vpop.f32.mrb[0].mxu0
        %v2260 = vpop.f32.mrb[0].mxu0
        %v2261 = vadd.f32 %v2173, %v2260
        %v2262 = vpop.f32.mrb[0].mxu0
        %2263 = vmatprep.mubr.bf16.mxu0 0
        %2264 = vmatmul.mubr.bf16.gmra.mrb[0].mxu0 %v1905
        %v2265 = vpop.f32.mrb[0].mxu0
        %v2266 = vadd.f32 %v2178, %v2265
        %v2267 = vpop.f32.mrb[0].mxu0
        %v2268 = vpop.f32.mrb[0].mxu0
        %v2269 = vadd.f32 %v2181, %v2268
        %v2270 = vpop.f32.mrb[0].mxu0
        %2271 = vmatprep.mubr.bf16.mxu0 0
        %2272 = vmatmul.mubr.bf16.gmra.mrb[0].mxu0 %v1908
        %v2273 = vpop.f32.mrb[0].mxu0
        %v2274 = vadd.f32 %v2186, %v2273
        %v2275 = vpop.f32.mrb[0].mxu0
        %v2276 = vpop.f32.mrb[0].mxu0
        %v2277 = vadd.f32 %v2189, %v2276
        %v2278 = vpop.f32.mrb[0].mxu0
        %2279 = vmatprep.mubr.bf16.mxu0 0
        %2280 = vmatmul.mubr.bf16.gmra.mrb[0].mxu0 %v1911
        %v2281 = vpop.f32.mrb[0].mxu0
        %v2282 = vadd.f32 %v2194, %v2281
        %v2283 = vpop.f32.mrb[0].mxu0
        %v2284 = vpop.f32.mrb[0].mxu0
        %v2285 = vpop.f32.mrb[0].mxu0
        %2286 = vdwg.mxu0
        %v2287 = vtanh.pop %v2234
        %v2288 = vtanh.pop %v2237
        %v2289 = vtanh.pop %v2242
        %v2290 = vtanh.pop %v2245
        %v2291 = vtanh.pop %v2250
        %v2292 = vtanh.pop %v2253
        %v2293 = vtanh.pop %v2258
        %v2294 = vtanh.pop %v2261
        %v2295 = vtanh.pop %v2266
        %v2296 = vtanh.pop %v2269
        %v2297 = vtanh.pop %v2274
        %v2298 = vtanh.pop %v2277
        %v2299 = vtanh.pop %v2282
        %v2300 = vmul.f32 %v2287, 0.05
        %v2301 = vmul.f32 %v2288, 0.05
        %v2302 = vmul.f32 %v2289, 0.05
        %v2303 = vmul.f32 %v2290, 0.05
        %v2304 = vmul.f32 %v2291, 0.05
        %v2305 = vmul.f32 %v2292, 0.05
        %v2306 = vmul.f32 %v2293, 0.05
        %v2307 = vmul.f32 %v2294, 0.05
        %v2308 = vmul.f32 %v2295, 0.05
        %v2309 = vmul.f32 %v2296, 0.05
        %v2310 = vmul.f32 %v2297, 0.05
        %v2311 = vmul.f32 %v2298, 0.05
        %v2312 = vmul.f32 %v2299, 0.05
        %v2313 = vlaneseq
        %v2314 = vand.u32 %v2313, 127
        %vm2315 = vcmp.lt.s32.totalorder %v2314, 6
        %v2316 = vsel %vm2315, %v301, 0.0
        %v2317 = vsel %vm2315, %v302, 0.0
        %v2318 = vsel %vm2315, %v303, 0.0
        %v2319 = vsel %vm2315, %v304, 0.0
        %v2320 = vsel %vm2315, %v305, 0.0
        %v2321 = vsel %vm2315, %v306, 0.0
        %v2322 = vsel %vm2315, %v307, 0.0
        %v2323 = vsel %vm2315, %v308, 0.0
        %v2324 = vsel %vm2315, %v309, 0.0
        %v2325 = vsel %vm2315, %v310, 0.0
        %v2326 = vsel %vm2315, %v311, 0.0
        %v2327 = vsel %vm2315, %v312, 0.0
        %v2328 = vsel %vm2315, %v313, 0.0
        %v2329 = vadd.f32 %v2300, %v2316
        %v2330 = vadd.f32 %v2301, %v2317
        %v2331 = vadd.f32 %v2302, %v2318
        %v2332 = vadd.f32 %v2303, %v2319
        %v2333 = vadd.f32 %v2304, %v2320
        %v2334 = vadd.f32 %v2305, %v2321
        %v2335 = vadd.f32 %v2306, %v2322
        %v2336 = vadd.f32 %v2307, %v2323
        %v2337 = vadd.f32 %v2308, %v2324
        %v2338 = vadd.f32 %v2309, %v2325
        %v2339 = vadd.f32 %v2310, %v2326
        %v2340 = vadd.f32 %v2311, %v2327
        %v2341 = vadd.f32 %v2312, %v2328
        %v2342 = vmax.f32 %v2329, -1.0
        %v2343 = vmax.f32 %v2330, -1.0
        %v2344 = vmax.f32 %v2331, -1.0
        %v2345 = vmax.f32 %v2332, -1.0
        %v2346 = vmax.f32 %v2333, -1.0
        %v2347 = vmax.f32 %v2334, -1.0
        %v2348 = vmax.f32 %v2335, -1.0
        %v2349 = vmax.f32 %v2336, -1.0
        %v2350 = vmax.f32 %v2337, -1.0
        %v2351 = vmax.f32 %v2338, -1.0
        %v2352 = vmax.f32 %v2339, -1.0
        %v2353 = vmax.f32 %v2340, -1.0
        %v2354 = vmax.f32 %v2341, -1.0
        %v2355 = vmin.f32 %v2342, 1.0
        %v2356 = vmin.f32 %v2343, 1.0
        %v2357 = vmin.f32 %v2344, 1.0
        %v2358 = vmin.f32 %v2345, 1.0
        %v2359 = vmin.f32 %v2346, 1.0
        %v2360 = vmin.f32 %v2347, 1.0
        %v2361 = vmin.f32 %v2348, 1.0
        %v2362 = vmin.f32 %v2349, 1.0
        %v2363 = vmin.f32 %v2350, 1.0
        %v2364 = vmin.f32 %v2351, 1.0
        %v2365 = vmin.f32 %v2352, 1.0
        %v2366 = vmin.f32 %v2353, 1.0
        %v2367 = vmin.f32 %v2354, 1.0
        %2368 = vst [vmem:[%s280] sm:$0xff] %v2355
        %2369 = vst [vmem:[%s280 + $0x8] sm:$0xff] %v2356
        %2370 = vst [vmem:[%s280 + $0x10] sm:$0xff] %v2357
        %2371 = vst [vmem:[%s280 + $0x18] sm:$0xff] %v2358
        %2372 = vst [vmem:[%s280 + $0x20] sm:$0xff] %v2359
        %2373 = vst [vmem:[%s280 + $0x28] sm:$0xff] %v2360
        %2374 = vst [vmem:[%s280 + $0x30] sm:$0xff] %v2361
        %2375 = vst [vmem:[%s280 + $0x38] sm:$0xff] %v2362
        %2376 = vst [vmem:[%s280 + $0x40] sm:$0xff] %v2363
        %2377 = vst [vmem:[%s280 + $0x48] sm:$0xff] %v2364
        %2378 = vst [vmem:[%s280 + $0x50] sm:$0xff] %v2365
        %2379 = vst [vmem:[%s280 + $0x58] sm:$0xff] %v2366
        %2380 = vst [vmem:[%s280 + $0x60] sm:$0xff] %v2367
        %s2381 = sand.u32 %s178, 1
        %s2382 = sand.u32 %s178, 1
        %s2383 = smul.addr %s2382, 104
        %s2384 = scalar_lea.vmem [#allocation2], %s2383
        // Predicated region
        $region49: #{_lambda_.1} parent=47 // pred_check
          %p2385 = pneg %p188
        $region50: #{_lambda_.1} parent=47 // pred_check_branch
          %2387 = sbr.rel (%p2385) target = $region52
        $region51: #{_lambda_.1} parent=47 // pred_region
          %s2388 = smul.u32 13, %s18
          %s2389 = ssub.s32 25, %s2388
          %p2390 = scmp.lt.s32.totalorder %s2389, 13
          %s2391 = scalar_select %p2390, %s2389, 13
          %s2392 = smul.u32 128, %s2391
          %p2393 = scmp.ne.s32.totalorder 0, %s2392
          %s2394 = smul.addr %s2388, 8
          %s2395 = scalar_lea.vmem %s7, %s2394
          // Predicated region
          $region53: #{_lambda_.1} parent=51 // pred_check
            %p2396 = pneg %p2393
          $region54: #{_lambda_.1} parent=51 // pred_check_branch
            %2398 = sbr.rel (%p2396) target = $region56
          $region55: #{_lambda_.1} parent=51 // pred_region
            // Predicated region
            $region57: #{_lambda_.1} parent=55 // pred_check
              _
            $region58: #{_lambda_.1} parent=55 // pred_check_branch
              %2400 = sbr.rel (0) target = $region60
            $region59: #{_lambda_.1} parent=55 // pred_region
              // Predicated region
              $region79: #{_lambda_.1} parent=59 // pred_check
                _
              $region80: #{_lambda_.1} parent=59 // pred_check_branch
                %2474 = sbr.rel (0) target = $region82
              $region81: #{_lambda_.1} parent=59 // pred_region
                %s2475 = sdiv.u32.pop %s2391, 13
                %s2476 = srem.u32.pop %s2391, 13
                // While loop
                $region83: #{_lambda_.1} parent=81 // loop_pre_header
                  _
                $region84: #{_lambda_.1} parent=81 // loop_header
                  %s2478 = sphi 0, %s2480
                  %p2479 = scmp.ge.s32.totalorder %s2478, %s2475
                  %s2483 = sphi 0, %s2514
                  %s2484 = sphi %s2384, %s2517
                  %s2485 = sphi %s2395, %s2518
                $region85: #{_lambda_.1} parent=81 // loop_header_branch
                  %2482 = sbr.rel (%p2479) target = $region89
                $region86: #{_lambda_.1} parent=81 // loop_body
                  %v2486 = vld [vmem:[%s2484] sm:$0xff]
                  %2487 = vst [vmem:[%s2485] sm:$0xff] %v2486
                  %v2488 = vld [vmem:[%s2484 + $0x8] sm:$0xff]
                  %2489 = vst [vmem:[%s2485 + $0x8] sm:$0xff] %v2488
                  %v2490 = vld [vmem:[%s2484 + $0x10] sm:$0xff]
                  %2491 = vst [vmem:[%s2485 + $0x10] sm:$0xff] %v2490
                  %v2492 = vld [vmem:[%s2484 + $0x18] sm:$0xff]
                  %2493 = vst [vmem:[%s2485 + $0x18] sm:$0xff] %v2492
                  %v2494 = vld [vmem:[%s2484 + $0x20] sm:$0xff]
                  %2495 = vst [vmem:[%s2485 + $0x20] sm:$0xff] %v2494
                  %v2496 = vld [vmem:[%s2484 + $0x28] sm:$0xff]
                  %2497 = vst [vmem:[%s2485 + $0x28] sm:$0xff] %v2496
                  %v2498 = vld [vmem:[%s2484 + $0x30] sm:$0xff]
                  %2499 = vst [vmem:[%s2485 + $0x30] sm:$0xff] %v2498
                  %v2500 = vld [vmem:[%s2484 + $0x38] sm:$0xff]
                  %2501 = vst [vmem:[%s2485 + $0x38] sm:$0xff] %v2500
                  %v2502 = vld [vmem:[%s2484 + $0x40] sm:$0xff]
                  %2503 = vst [vmem:[%s2485 + $0x40] sm:$0xff] %v2502
                  %v2504 = vld [vmem:[%s2484 + $0x48] sm:$0xff]
                  %2505 = vst [vmem:[%s2485 + $0x48] sm:$0xff] %v2504
                  %v2506 = vld [vmem:[%s2484 + $0x50] sm:$0xff]
                  %2507 = vst [vmem:[%s2485 + $0x50] sm:$0xff] %v2506
                  %v2508 = vld [vmem:[%s2484 + $0x58] sm:$0xff]
                  %2509 = vst [vmem:[%s2485 + $0x58] sm:$0xff] %v2508
                  %v2510 = vld [vmem:[%s2484 + $0x60] sm:$0xff]
                  %2511 = vst [vmem:[%s2485 + $0x60] sm:$0xff] %v2510
                  %s2512 = sadd.s32 1, %s2483
                  %p2513 = scmp.ge.s32.totalorder %s2512, %s2475
                  %s2514 = scalar_select %p2513, 0, %s2512
                  %s2515 = smul.u32 %s2514, 104
                  %s2516 = smul.u32 %s2514, 104
                  %s2517 = scalar_lea.vmem %s2384, %s2515 [#allocation2]
                  %s2518 = scalar_lea.vmem %s2395, %s2516
                $region87: #{_lambda_.1} parent=81 // loop_footer
                  %s2480 = sadd.s32 %s2478, 1
                $region88: #{_lambda_.1} parent=81 // loop_footer_branch
                  %2477 = sbr.rel target = $region84
                $region89: #{_lambda_.1} parent=81 // loop_exit
                  _
                %s2519 = sdiv.u32.pop %s2391, 13
                %s2520 = srem.u32.pop %s2391, 13
                %s2521 = smul.u32 %s2519, 13
                %s2522 = smul.u32 8, %s2521
                %s2523 = scalar_lea.vmem %s2384, %s2522 [#allocation2]
                %s2524 = smul.u32 8, %s2521
                %s2525 = scalar_lea.vmem %s2395, %s2524
                // While loop
                $region90: #{_lambda_.1} parent=81 // loop_pre_header
                  _
                $region91: #{_lambda_.1} parent=81 // loop_header
                  %s2527 = sphi 0, %s2529
                  %p2528 = scmp.ge.s32.totalorder %s2527, %s2520
                  %s2532 = sphi 0, %s2539
                  %s2533 = sphi %s2523, %s2542
                  %s2534 = sphi %s2525, %s2543
                $region92: #{_lambda_.1} parent=81 // loop_header_branch
                  %2531 = sbr.rel (%p2528) target = $region96
                $region93: #{_lambda_.1} parent=81 // loop_body
                  %v2535 = vld [vmem:[%s2533] sm:$0xff]
                  %2536 = vst [vmem:[%s2534] sm:$0xff] %v2535
                  %s2537 = sadd.s32 1, %s2532
                  %p2538 = scmp.ge.s32.totalorder %s2537, %s2520
                  %s2539 = scalar_select %p2538, 0, %s2537
                  %s2540 = smul.u32 %s2539, 8
                  %s2541 = smul.u32 %s2539, 8
                  %s2542 = scalar_lea.vmem %s2523, %s2540 [#allocation2]
                  %s2543 = scalar_lea.vmem %s2525, %s2541
                $region94: #{_lambda_.1} parent=81 // loop_footer
                  %s2529 = sadd.s32 %s2527, 1
                $region95: #{_lambda_.1} parent=81 // loop_footer_branch
                  %2526 = sbr.rel target = $region91
                $region96: #{_lambda_.1} parent=81 // loop_exit
                  _
              $region82: #{_lambda_.1} parent=59 // pred_fallthru
                _
              // Predicated region
              $region97: #{_lambda_.1} parent=59 // pred_check
                _
              $region98: #{_lambda_.1} parent=59 // pred_check_branch
                %2545 = sbr.rel target = $region100
              $region99: #{_lambda_.1} parent=59 // pred_region
                _
              $region100: #{_lambda_.1} parent=59 // pred_fallthru
                _
            $region60: #{_lambda_.1} parent=55 // pred_fallthru
              _
            // Predicated region
            $region61: #{_lambda_.1} parent=55 // pred_check
              _
            $region62: #{_lambda_.1} parent=55 // pred_check_branch
              %2402 = sbr.rel target = $region64
            $region63: #{_lambda_.1} parent=55 // pred_region
              %s2404 = sdiv.u32.pop %s2391, 13
              %s2405 = srem.u32.pop %s2391, 13
              // While loop
              $region65: #{_lambda_.1} parent=63 // loop_pre_header
                _
              $region66: #{_lambda_.1} parent=63 // loop_header
                %s2407 = sphi 0, %s2409
                %p2408 = scmp.ge.s32.totalorder %s2407, %s2404
                %s2412 = sphi 0, %s2443
                %s2413 = sphi %s2384, %s2446
                %s2414 = sphi %s2395, %s2447
              $region67: #{_lambda_.1} parent=63 // loop_header_branch
                %2411 = sbr.rel (%p2408) target = $region71
              $region68: #{_lambda_.1} parent=63 // loop_body
                %v2415 = vld [vmem:[%s2413] sm:$0xff]
                %2416 = vst [vmem:[%s2414] sm:$0xff] %v2415
                %v2417 = vld [vmem:[%s2413 + $0x8] sm:$0xff]
                %2418 = vst [vmem:[%s2414 + $0x8] sm:$0xff] %v2417
                %v2419 = vld [vmem:[%s2413 + $0x10] sm:$0xff]
                %2420 = vst [vmem:[%s2414 + $0x10] sm:$0xff] %v2419
                %v2421 = vld [vmem:[%s2413 + $0x18] sm:$0xff]
                %2422 = vst [vmem:[%s2414 + $0x18] sm:$0xff] %v2421
                %v2423 = vld [vmem:[%s2413 + $0x20] sm:$0xff]
                %2424 = vst [vmem:[%s2414 + $0x20] sm:$0xff] %v2423
                %v2425 = vld [vmem:[%s2413 + $0x28] sm:$0xff]
                %2426 = vst [vmem:[%s2414 + $0x28] sm:$0xff] %v2425
                %v2427 = vld [vmem:[%s2413 + $0x30] sm:$0xff]
                %2428 = vst [vmem:[%s2414 + $0x30] sm:$0xff] %v2427
                %v2429 = vld [vmem:[%s2413 + $0x38] sm:$0xff]
                %2430 = vst [vmem:[%s2414 + $0x38] sm:$0xff] %v2429
                %v2431 = vld [vmem:[%s2413 + $0x40] sm:$0xff]
                %2432 = vst [vmem:[%s2414 + $0x40] sm:$0xff] %v2431
                %v2433 = vld [vmem:[%s2413 + $0x48] sm:$0xff]
                %2434 = vst [vmem:[%s2414 + $0x48] sm:$0xff] %v2433
                %v2435 = vld [vmem:[%s2413 + $0x50] sm:$0xff]
                %2436 = vst [vmem:[%s2414 + $0x50] sm:$0xff] %v2435
                %v2437 = vld [vmem:[%s2413 + $0x58] sm:$0xff]
                %2438 = vst [vmem:[%s2414 + $0x58] sm:$0xff] %v2437
                %v2439 = vld [vmem:[%s2413 + $0x60] sm:$0xff]
                %2440 = vst [vmem:[%s2414 + $0x60] sm:$0xff] %v2439
                %s2441 = sadd.s32 1, %s2412
                %p2442 = scmp.ge.s32.totalorder %s2441, %s2404
                %s2443 = scalar_select %p2442, 0, %s2441
                %s2444 = smul.u32 %s2443, 104
                %s2445 = smul.u32 %s2443, 104
                %s2446 = scalar_lea.vmem %s2384, %s2444 [#allocation2]
                %s2447 = scalar_lea.vmem %s2395, %s2445
              $region69: #{_lambda_.1} parent=63 // loop_footer
                %s2409 = sadd.s32 %s2407, 1
              $region70: #{_lambda_.1} parent=63 // loop_footer_branch
                %2406 = sbr.rel target = $region66
              $region71: #{_lambda_.1} parent=63 // loop_exit
                _
              %s2448 = sdiv.u32.pop %s2391, 13
              %s2449 = srem.u32.pop %s2391, 13
              %s2450 = smul.u32 %s2448, 13
              %s2451 = smul.u32 8, %s2450
              %s2452 = scalar_lea.vmem %s2384, %s2451 [#allocation2]
              %s2453 = smul.u32 8, %s2450
              %s2454 = scalar_lea.vmem %s2395, %s2453
              // While loop
              $region72: #{_lambda_.1} parent=63 // loop_pre_header
                _
              $region73: #{_lambda_.1} parent=63 // loop_header
                %s2456 = sphi 0, %s2458
                %p2457 = scmp.ge.s32.totalorder %s2456, %s2449
                %s2461 = sphi 0, %s2468
                %s2462 = sphi %s2452, %s2471
                %s2463 = sphi %s2454, %s2472
              $region74: #{_lambda_.1} parent=63 // loop_header_branch
                %2460 = sbr.rel (%p2457) target = $region78
              $region75: #{_lambda_.1} parent=63 // loop_body
                %v2464 = vld [vmem:[%s2462] sm:$0xff]
                %2465 = vst [vmem:[%s2463] sm:$0xff] %v2464
                %s2466 = sadd.s32 1, %s2461
                %p2467 = scmp.ge.s32.totalorder %s2466, %s2449
                %s2468 = scalar_select %p2467, 0, %s2466
                %s2469 = smul.u32 %s2468, 8
                %s2470 = smul.u32 %s2468, 8
                %s2471 = scalar_lea.vmem %s2452, %s2469 [#allocation2]
                %s2472 = scalar_lea.vmem %s2454, %s2470
              $region76: #{_lambda_.1} parent=63 // loop_footer
                %s2458 = sadd.s32 %s2456, 1
              $region77: #{_lambda_.1} parent=63 // loop_footer_branch
                %2455 = sbr.rel target = $region73
              $region78: #{_lambda_.1} parent=63 // loop_exit
                _
            $region64: #{_lambda_.1} parent=55 // pred_fallthru
              _
          $region56: #{_lambda_.1} parent=51 // pred_fallthru
            _
          %2546 = vnop
        $region52: #{_lambda_.1} parent=47 // pred_fallthru
          _
      $region48: #{_lambda_.1} parent=5 // pred_fallthru
        _
      %p2547 = scmp.le.s32.totalorder 2, %s13
      // Predicated region
      $region101: #{_lambda_.1} parent=5 // pred_check
        %p2548 = pneg %p2547
      $region102: #{_lambda_.1} parent=5 // pred_check_branch
        %2550 = sbr.rel (%p2548) target = $region104
      $region103: #{_lambda_.1} parent=5 // pred_region
        %s2551 = ssub.s32 %s13, 2
        // Predicated region
        $region105: #{_lambda_.1} parent=103 // pred_check
          %p2552 = pneg %p194
        $region106: #{_lambda_.1} parent=103 // pred_check_branch
          %2554 = sbr.rel (%p2552) target = $region108
        $region107: #{_lambda_.1} parent=103 // pred_region
          %s2555 = sand.u32 %s179, 1
          %s2556 = sand.u32 %s179, 1
          %s2557 = smul.addr %s2556, 104
          %s2558 = scalar_lea.vmem [#allocation2], %s2557
        $region108: #{_lambda_.1} parent=103 // pred_fallthru
          _
      $region104: #{_lambda_.1} parent=5 // pred_fallthru
        _
    $region6: #{_lambda_.1} parent=1 // loop_footer
      %s17 = sadd.s32 1, %s13
    $region7: #{_lambda_.1} parent=1 // loop_footer_branch
      %12 = sbr.rel target = $region3
    $region8: #{_lambda_.1} parent=1 // loop_exit
      _

</llo_original>
